<compile_context>
chip_gen: v7x
topology: tpu7x:2x2x1
jax: 0.10.0
libtpu: 0.0.40
codegen_flags: <defaults>
</compile_context>

<pallas_src>
import math
import jax
import jax.numpy as jnp
import numpy as np
from jax.experimental import pallas as pl
from jax.experimental.pallas import tpu as pltpu


def _round_up(x, m):
    return ((x + m - 1) // m) * m


# --------------------------------------------------------------------------
# Pallas kernel: all four CDN prediction heads fused into one call.
# --------------------------------------------------------------------------
def _cdn_heads_kernel(h_ref, v_ref,
                      w_obj_ref, b_obj_ref,
                      w_verb_ref, b_verb_ref,
                      w1f_ref, b1f_ref,
                      ws2_ref, bs2_ref, wo2_ref, bo2_ref,
                      w3bd_ref, b3f_ref,
                      obj_logits_ref, verb_logits_ref, boxes_ref):
    h = h_ref[0]       # (TN, D) bf16 -- hopd decoder features
    hv = v_ref[0]      # (TN, D) bf16 -- interaction decoder features
    d = h.shape[-1]

    # obj_class_embed / verb_class_embed: Linear heads, lane-padded widths
    obj_logits_ref[0] = (
        jnp.dot(h, w_obj_ref[...], preferred_element_type=jnp.float32)
        + b_obj_ref[...])
    verb_logits_ref[0] = (
        jnp.dot(hv, w_verb_ref[...], preferred_element_type=jnp.float32)
        + b_verb_ref[...])

    # Fused first layer of both bbox MLPs: one (TN, D) @ (D, 2D) matmul.
    x1 = jnp.maximum(
        jnp.dot(h, w1f_ref[...], preferred_element_type=jnp.float32)
        + b1f_ref[...], 0.0)                       # (TN, 2D) f32
    x_sub = x1[:, :d].astype(jnp.bfloat16)
    x_obj = x1[:, d:].astype(jnp.bfloat16)

    # Second layers kept separate (block-diag here would double the D x D FLOPs).
    x2s = jnp.maximum(
        jnp.dot(x_sub, ws2_ref[...], preferred_element_type=jnp.float32)
        + bs2_ref[...], 0.0)
    x2o = jnp.maximum(
        jnp.dot(x_obj, wo2_ref[...], preferred_element_type=jnp.float32)
        + bo2_ref[...], 0.0)
    x2 = jnp.concatenate([x2s, x2o], axis=-1).astype(jnp.bfloat16)  # (TN, 2D)

    # Fused third layer: block-diagonal (2D, 8). One lane-dense box write:
    # sub box -> lanes 0:4, obj box -> lanes 4:8.
    boxes_ref[0] = jax.nn.sigmoid(
        jnp.dot(x2, w3bd_ref[...], preferred_element_type=jnp.float32)
        + b3f_ref[...])


def _full_spec(arr):
    # whole-array block, same block for every grid point (weights stay resident)
    nd = arr.ndim
    return pl.BlockSpec(arr.shape, lambda l, n, _nd=nd: (0,) * _nd)


def run_cdn_heads(hopd_flat, inter_flat, p, *, tile_n=256):
    """hopd_flat: (L_h, N, D), inter_flat: (L_i, N, D) ->
       obj_logits (L_h,N,Cobj), verb_logits (L_i,N,Cverb),
       sub_boxes (L_h,N,4), obj_boxes (L_h,N,4)."""
    L_h, N, D = hopd_flat.shape
    L_i = inter_flat.shape[0]
    L = max(L_h, L_i)

    # Pad (possibly different) layer counts to one shared grid extent.
    if L_h < L:
        hopd_flat = jnp.pad(hopd_flat, ((0, L - L_h), (0, 0), (0, 0)))
    if L_i < L:
        inter_flat = jnp.pad(inter_flat, ((0, L - L_i), (0, 0), (0, 0)))

    # Tile the row axis N (multiple of 8 sublanes), pad rows with zeros.
    tn = min(tile_n, _round_up(N, 8))
    n_pad = _round_up(N, tn)
    if n_pad != N:
        hopd_flat = jnp.pad(hopd_flat, ((0, 0), (0, n_pad - N), (0, 0)))
        inter_flat = jnp.pad(inter_flat, ((0, 0), (0, n_pad - N), (0, 0)))

    # Lane-pad the class heads to multiples of 128 (unmasked 128-lane stores).
    c_obj = p["w_obj"].shape[1]
    c_verb = p["w_verb"].shape[1]
    c_obj_p = _round_up(c_obj, 128)
    c_verb_p = _round_up(c_verb, 128)

    def pad_lane(x, to):
        return jnp.pad(x, ((0, 0), (0, to - x.shape[1])))

    def bf16(x):
        return x.astype(jnp.bfloat16)

    w_obj = bf16(pad_lane(p["w_obj"], c_obj_p))
    b_obj = pad_lane(p["b_obj"], c_obj_p).astype(jnp.float32)
    w_verb = bf16(pad_lane(p["w_verb"], c_verb_p))
    b_verb = pad_lane(p["b_verb"], c_verb_p).astype(jnp.float32)

    # Fused first-layer weights of the two bbox MLPs: (D, 2D).
    w1f = bf16(jnp.concatenate([p["ws1"], p["wo1"]], axis=1))
    b1f = jnp.concatenate([p["bs1"], p["bo1"]], axis=1).astype(jnp.float32)
    ws2 = bf16(p["ws2"])
    bs2 = p["bs2"].astype(jnp.float32)
    wo2 = bf16(p["wo2"])
    bo2 = p["bo2"].astype(jnp.float32)
    # Block-diagonal final projection: (2D, 8).
    w3bd = jnp.zeros((2 * D, 8), jnp.float32)
    w3bd = w3bd.at[:D, :4].set(p["ws3"]).at[D:, 4:].set(p["wo3"])
    w3bd = bf16(w3bd)
    b3f = jnp.concatenate([p["bs3"], p["bo3"]], axis=1).astype(jnp.float32)

    weights = [w_obj, b_obj, w_verb, b_verb, w1f, b1f,
               ws2, bs2, wo2, bo2, w3bd, b3f]

    grid = (L, n_pad // tn)
    act_spec = pl.BlockSpec((1, tn, D), lambda l, n: (l, n, 0))
    in_specs = [act_spec, act_spec] + [_full_spec(w) for w in weights]
    out_specs = (
        pl.BlockSpec((1, tn, c_obj_p), lambda l, n: (l, n, 0)),
        pl.BlockSpec((1, tn, c_verb_p), lambda l, n: (l, n, 0)),
        pl.BlockSpec((1, tn, 8), lambda l, n: (l, n, 0)),
    )
    out_shape = (
        jax.ShapeDtypeStruct((L, n_pad, c_obj_p), jnp.float32),
        jax.ShapeDtypeStruct((L, n_pad, c_verb_p), jnp.float32),
        jax.ShapeDtypeStruct((L, n_pad, 8), jnp.float32),
    )

    obj_logits, verb_logits, boxes = pl.pallas_call(
        _cdn_heads_kernel,
        grid=grid,
        in_specs=in_specs,
        out_specs=out_specs,
        out_shape=out_shape,
        compiler_params=pltpu.CompilerParams(
            dimension_semantics=("parallel", "parallel")),
    )(bf16(hopd_flat), bf16(inter_flat), *weights)

    obj_logits = obj_logits[:L_h, :N, :c_obj]
    verb_logits = verb_logits[:L_i, :N, :c_verb]
    sub_boxes = boxes[:L_h, :N, :4]
    obj_boxes = boxes[:L_h, :N, 4:8]
    return obj_logits, verb_logits, sub_boxes, obj_boxes


# --------------------------------------------------------------------------
# Deterministic stand-ins for the injected encoder / decoder (plain JAX glue)
# --------------------------------------------------------------------------
def sine_pos_embed(bs, d, h, w):
    yy, xx = jnp.meshgrid(jnp.arange(h, dtype=jnp.float32),
                          jnp.arange(w, dtype=jnp.float32), indexing="ij")
    dim_t = jnp.arange(d // 2, dtype=jnp.float32)
    freq = 1.0 / (10000.0 ** (2.0 * (dim_t // 2) / d))
    pos_x = xx[..., None] * freq          # (h, w, d/2)
    pos_y = yy[..., None] * freq          # (h, w, d/2)
    pe = jnp.concatenate([jnp.sin(pos_x), jnp.cos(pos_y)], axis=-1)  # (h, w, d)
    return jnp.broadcast_to(pe.transpose(2, 0, 1)[None], (bs, d, h, w))


def stand_in_encoder(features, proj_w):
    # features: (bs, C_in, H, W) NCHW -> encoder_features (bs, D, H, W), pos (bs, D, H, W)
    bs, c_in, h, w = features.shape
    enc = jnp.einsum("bchw,cd->bdhw", features, proj_w)
    pos = sine_pos_embed(bs, proj_w.shape[1], h, w)
    return enc, pos


def stand_in_decoder_stack(memory, key_padding_mask, query_embed, pos_embed,
                           layer_ws, tgt_init):
    """memory: (S, bs, D); query_embed: (Q, bs, D); pos_embed: (S, bs, D).
    Returns stacked per-layer outputs (L, bs, Q, D) and the final tgt (Q, bs, D)."""
    d = memory.shape[-1]
    tgt = tgt_init
    bias = jnp.where(key_padding_mask[:, None, :], -1e9, 0.0)  # (bs, 1, S)
    outs = []
    for (wq, wk, wv) in layer_ws:
        q = jnp.einsum("qbd,de->qbe", tgt + query_embed, wq)
        k = jnp.einsum("sbd,de->sbe", memory + pos_embed, wk)
        v = jnp.einsum("sbd,de->sbe", memory, wv)
        attn = jax.nn.softmax(
            jnp.einsum("qbd,sbd->bqs", q, k) / math.sqrt(d) + bias, axis=-1)
        tgt = tgt + jnp.einsum("bqs,sbd->qbd", attn, v)
        outs.append(tgt)
    stacked = jnp.stack(outs, axis=0).transpose(0, 2, 1, 3)  # (L, bs, Q, D)
    return stacked, tgt


# --------------------------------------------------------------------------
# CDN forward (task='hoi')
# --------------------------------------------------------------------------
def cdn_forward(features, mask, params, num_dec_layers_hopd, num_dec_layers_interaction):
    bs = features.shape[0]
    hidden = params["query_embed"].shape[1]
    num_queries = params["query_embed"].shape[0]

    # encoder
    encoder_features, pos = stand_in_encoder(features, params["enc_proj"])

    # pos_embed = pos.flatten(2).permute(2, 0, 1) -> (S, bs, D)
    pos_embed = pos.reshape(bs, hidden, -1).transpose(2, 0, 1)
    # query_embed.weight.unsqueeze(1).repeat(1, bs, 1) -> (Q, bs, D)
    query_embed = jnp.broadcast_to(
        params["query_embed"][:, None, :], (num_queries, bs, hidden))

    # hoi_decoder stand-in: HOPD stack then interaction stack chained on its output
    memory = encoder_features.reshape(bs, hidden, -1).transpose(2, 0, 1)  # (S, bs, D)
    key_padding_mask = mask.reshape(bs, -1)
    hopd_out, hopd_tgt = stand_in_decoder_stack(
        memory, key_padding_mask, query_embed, pos_embed,
        params["hopd_layers"], jnp.zeros_like(query_embed))
    interaction_out, _ = stand_in_decoder_stack(
        memory, key_padding_mask, query_embed, pos_embed,
        params["inter_layers"], hopd_tgt)

    L_h = hopd_out.shape[0]
    L_i = interaction_out.shape[0]
    N = bs * num_queries
    hopd_flat = hopd_out.reshape(L_h, N, hidden)
    inter_flat = interaction_out.reshape(L_i, N, hidden)

    # ---- fused Pallas head kernel ----
    obj_f, verb_f, sub_f, objb_f = run_cdn_heads(hopd_flat, inter_flat, params)

    c_obj = obj_f.shape[-1]
    c_verb = verb_f.shape[-1]
    outputs_obj_class = obj_f.reshape(L_h, bs, num_queries, c_obj)
    outputs_verb_class = verb_f.reshape(L_i, bs, num_queries, c_verb)
    outputs_sub_coord = sub_f.reshape(L_h, bs, num_queries, 4)
    outputs_obj_coord = objb_f.reshape(L_h, bs, num_queries, 4)

    out = {
        "pred_obj_logits": outputs_obj_class[-1],
        "pred_verb_logits": outputs_verb_class[-1],
        "pred_sub_boxes": outputs_sub_coord[-1],
        "pred_obj_boxes": outputs_obj_coord[-1],
    }
    min_l = min(num_dec_layers_hopd, num_dec_layers_interaction)
    out["aux_outputs"] = [
        {"pred_obj_logits": a, "pred_verb_logits": b,
         "pred_sub_boxes": c, "pred_obj_boxes": d}
        for a, b, c, d in zip(outputs_obj_class[-min_l:-1],
                              outputs_verb_class[-min_l:-1],
                              outputs_sub_coord[-min_l:-1],
                              outputs_obj_coord[-min_l:-1])
    ]
    aux = {
        "obj_logits": obj_f, "verb_logits": verb_f,
        "sub_boxes": sub_f, "obj_boxes": objb_f,
        "hopd_flat": hopd_flat, "inter_flat": inter_flat,
    }
    return out, aux


# --------------------------------------------------------------------------
# Deterministic parameter construction (fixed: no finite key-pool exhaustion)
# --------------------------------------------------------------------------
def build_params(key, c_in, hidden, num_queries, num_obj_classes, num_verb_classes,
                 l_hopd, l_int):
    counter = [0]
    s = 0.02

    def w(shape):
        counter[0] += 1
        k = jax.random.fold_in(key, counter[0])
        return (s * jax.random.normal(k, shape)).astype(jnp.float32)

    p = {
        "enc_proj": w((c_in, hidden)),
        "query_embed": w((num_queries, hidden)),
        # obj_class_embed : Linear(hidden, num_obj_classes + 1)
        "w_obj": w((hidden, num_obj_classes + 1)),
        "b_obj": w((1, num_obj_classes + 1)),
        # verb_class_embed : Linear(hidden, num_verb_classes)
        "w_verb": w((hidden, num_verb_classes)),
        "b_verb": w((1, num_verb_classes)),
        # sub_bbox_embed : MLP(hidden, hidden, 4, 3)
        "ws1": w((hidden, hidden)), "bs1": w((1, hidden)),
        "ws2": w((hidden, hidden)), "bs2": w((1, hidden)),
        "ws3": w((hidden, 4)), "bs3": w((1, 4)),
        # obj_bbox_embed : MLP(hidden, hidden, 4, 3)
        "wo1": w((hidden, hidden)), "bo1": w((1, hidden)),
        "wo2": w((hidden, hidden)), "bo2": w((1, hidden)),
        "wo3": w((hidden, 4)), "bo3": w((1, 4)),
    }
    p["hopd_layers"] = [(w((hidden, hidden)), w((hidden, hidden)), w((hidden, hidden)))
                        for _ in range(l_hopd)]
    p["inter_layers"] = [(w((hidden, hidden)), w((hidden, hidden)), w((hidden, hidden)))
                         for _ in range(l_int)]
    return p


# Plain-JAX f32 reference for the head kernel (correctness check)
def heads_reference(hopd_flat, inter_flat, p):
    def lin(x, w, b):
        return jnp.dot(x, w) + b

    def mlp3(x, w1, b1, w2, b2, w3, b3):
        x = jnp.maximum(lin(x, w1, b1), 0.0)
        x = jnp.maximum(lin(x, w2, b2), 0.0)
        return lin(x, w3, b3)

    obj = lin(hopd_flat, p["w_obj"], p["b_obj"])
    verb = lin(inter_flat, p["w_verb"], p["b_verb"])
    sub = jax.nn.sigmoid(mlp3(hopd_flat, p["ws1"], p["bs1"], p["ws2"], p["bs2"],
                              p["ws3"], p["bs3"]))
    objb = jax.nn.sigmoid(mlp3(hopd_flat, p["wo1"], p["bo1"], p["wo2"], p["bo2"],
                               p["wo3"], p["bo3"]))
    return obj, verb, sub, objb


if __name__ == "__main__":
    key = jax.random.PRNGKey(0)
    k_param, k_feat = jax.random.split(key)

    bs, c_in, H, W = 2, 4, 8, 8
    hidden = 32
    num_queries = 8
    num_obj_classes = 4
    num_verb_classes = 6
    L_hopd, L_int = 3, 3

    params = build_params(k_param, c_in, hidden, num_queries,
                          num_obj_classes, num_verb_classes, L_hopd, L_int)

    features = jax.random.normal(k_feat, (bs, c_in, H, W), dtype=jnp.float32)
    mask = jnp.zeros((bs, H, W), dtype=bool)  # no padding

    out, aux = cdn_forward(features, mask, params, L_hopd, L_int)
    jax.block_until_ready(out)

    # sanity check: fused bf16-matmul Pallas heads vs plain-JAX f32 reference
    ref_obj, ref_verb, ref_sub, ref_objb = heads_reference(
        aux["hopd_flat"], aux["inter_flat"], params)
    np.testing.assert_allclose(np.asarray(aux["obj_logits"]), np.asarray(ref_obj),
                               rtol=2e-2, atol=2e-2)
    np.testing.assert_allclose(np.asarray(aux["verb_logits"]), np.asarray(ref_verb),
                               rtol=2e-2, atol=2e-2)
    np.testing.assert_allclose(np.asarray(aux["sub_boxes"]), np.asarray(ref_sub),
                               rtol=2e-2, atol=2e-2)
    np.testing.assert_allclose(np.asarray(aux["obj_boxes"]), np.asarray(ref_objb),
                               rtol=2e-2, atol=2e-2)

    print("KERNEL_OK")
</pallas_src>

<mosaic_0001>
module attributes {stable_mosaic.version = 11 : i64} {
  func.func @_cdn_heads_kernel(%arg0: i32, %arg1: i32, %arg2: memref<1x16x32xbf16, #tpu.memory_space<vmem>>, %arg3: memref<1x16x32xbf16, #tpu.memory_space<vmem>>, %arg4: memref<32x128xbf16, #tpu.memory_space<vmem>>, %arg5: memref<1x128xf32, #tpu.memory_space<vmem>>, %arg6: memref<32x128xbf16, #tpu.memory_space<vmem>>, %arg7: memref<1x128xf32, #tpu.memory_space<vmem>>, %arg8: memref<32x64xbf16, #tpu.memory_space<vmem>>, %arg9: memref<1x64xf32, #tpu.memory_space<vmem>>, %arg10: memref<32x32xbf16, #tpu.memory_space<vmem>>, %arg11: memref<1x32xf32, #tpu.memory_space<vmem>>, %arg12: memref<32x32xbf16, #tpu.memory_space<vmem>>, %arg13: memref<1x32xf32, #tpu.memory_space<vmem>>, %arg14: memref<64x8xbf16, #tpu.memory_space<vmem>>, %arg15: memref<1x8xf32, #tpu.memory_space<vmem>>, %arg16: memref<1x16x128xf32, #tpu.memory_space<vmem>>, %arg17: memref<1x16x128xf32, #tpu.memory_space<vmem>>, %arg18: memref<1x16x8xf32, #tpu.memory_space<vmem>>) attributes {dimension_semantics = [#tpu.dimension_semantics<parallel>, #tpu.dimension_semantics<parallel>], iteration_bounds = array<i64: 3, 1>, scalar_prefetch = 0 : i64, scratch_operands = 0 : i64, tpu.core_type = #tpu.core_type<tc>, window_params = [{transform_indices = @transform_0, window_bounds = array<i64: 1, 16, 32>}, {transform_indices = @transform_1, window_bounds = array<i64: 1, 16, 32>}, {pipeline_mode = #tpu.pipeline_mode<synchronous>, transform_indices = @transform_2, window_bounds = array<i64: 32, 128>}, {pipeline_mode = #tpu.pipeline_mode<synchronous>, transform_indices = @transform_3, window_bounds = array<i64: 1, 128>}, {pipeline_mode = #tpu.pipeline_mode<synchronous>, transform_indices = @transform_4, window_bounds = array<i64: 32, 128>}, {pipeline_mode = #tpu.pipeline_mode<synchronous>, transform_indices = @transform_5, window_bounds = array<i64: 1, 128>}, {pipeline_mode = #tpu.pipeline_mode<synchronous>, transform_indices = @transform_6, window_bounds = array<i64: 32, 64>}, {pipeline_mode = #tpu.pipeline_mode<synchronous>, transform_indices = @transform_7, window_bounds = array<i64: 1, 64>}, {pipeline_mode = #tpu.pipeline_mode<synchronous>, transform_indices = @transform_8, window_bounds = array<i64: 32, 32>}, {pipeline_mode = #tpu.pipeline_mode<synchronous>, transform_indices = @transform_9, window_bounds = array<i64: 1, 32>}, {pipeline_mode = #tpu.pipeline_mode<synchronous>, transform_indices = @transform_10, window_bounds = array<i64: 32, 32>}, {pipeline_mode = #tpu.pipeline_mode<synchronous>, transform_indices = @transform_11, window_bounds = array<i64: 1, 32>}, {pipeline_mode = #tpu.pipeline_mode<synchronous>, transform_indices = @transform_12, window_bounds = array<i64: 64, 8>}, {pipeline_mode = #tpu.pipeline_mode<synchronous>, transform_indices = @transform_13, window_bounds = array<i64: 1, 8>}, {transform_indices = @transform_14, window_bounds = array<i64: 1, 16, 128>}, {transform_indices = @transform_15, window_bounds = array<i64: 1, 16, 128>}, {transform_indices = @transform_16, window_bounds = array<i64: 1, 16, 8>}]} {
    %c0 = arith.constant 0 : index
    %c0_0 = arith.constant 0 : index
    %c0_1 = arith.constant 0 : index
    %0 = vector.load %arg2[%c0, %c0_0, %c0_1] : memref<1x16x32xbf16, #tpu.memory_space<vmem>>, vector<1x16x32xbf16>
    %1 = vector.shape_cast %0 : vector<1x16x32xbf16> to vector<16x32xbf16>
    %c0_2 = arith.constant 0 : index
    %c0_3 = arith.constant 0 : index
    %c0_4 = arith.constant 0 : index
    %2 = vector.load %arg3[%c0_2, %c0_3, %c0_4] : memref<1x16x32xbf16, #tpu.memory_space<vmem>>, vector<1x16x32xbf16>
    %3 = vector.shape_cast %2 : vector<1x16x32xbf16> to vector<16x32xbf16>
    %c0_5 = arith.constant 0 : index
    %c0_6 = arith.constant 0 : index
    %4 = vector.load %arg4[%c0_5, %c0_6] : memref<32x128xbf16, #tpu.memory_space<vmem>>, vector<32x128xbf16>
    %cst = arith.constant dense<0.000000e+00> : vector<16x128xf32>
    %5 = tpu.matmul %1, %4, %cst {dimension_numbers = #tpu.dot_dimension_numbers<[1], [0], [0], [1], [0, 0, 1, 1], [], []>} : vector<16x32xbf16>, vector<32x128xbf16>, vector<16x128xf32> -> vector<16x128xf32>
    %c0_7 = arith.constant 0 : index
    %c0_8 = arith.constant 0 : index
    %6 = vector.load %arg5[%c0_7, %c0_8] : memref<1x128xf32, #tpu.memory_space<vmem>>, vector<1x128xf32>
    %7 = vector.broadcast %6 : vector<1x128xf32> to vector<16x128xf32>
    %8 = arith.addf %5, %7 : vector<16x128xf32>
    %c0_9 = arith.constant 0 : index
    %c0_10 = arith.constant 0 : index
    %c0_11 = arith.constant 0 : index
    %9 = vector.load %arg16[%c0_9, %c0_10, %c0_11] : memref<1x16x128xf32, #tpu.memory_space<vmem>>, vector<1x16x128xf32>
    %10 = vector.shape_cast %9 : vector<1x16x128xf32> to vector<16x128xf32>
    %11 = vector.shape_cast %8 : vector<16x128xf32> to vector<1x16x128xf32>
    tpu.vector_store %arg16[%c0_9, %c0_10, %c0_11], %11 {strides = array<i32>} : memref<1x16x128xf32, #tpu.memory_space<vmem>>, vector<1x16x128xf32>,
    %c0_12 = arith.constant 0 : index
    %c0_13 = arith.constant 0 : index
    %12 = vector.load %arg6[%c0_12, %c0_13] : memref<32x128xbf16, #tpu.memory_space<vmem>>, vector<32x128xbf16>
    %cst_14 = arith.constant dense<0.000000e+00> : vector<16x128xf32>
    %13 = tpu.matmul %3, %12, %cst_14 {dimension_numbers = #tpu.dot_dimension_numbers<[1], [0], [0], [1], [0, 0, 1, 1], [], []>} : vector<16x32xbf16>, vector<32x128xbf16>, vector<16x128xf32> -> vector<16x128xf32>
    %c0_15 = arith.constant 0 : index
    %c0_16 = arith.constant 0 : index
    %14 = vector.load %arg7[%c0_15, %c0_16] : memref<1x128xf32, #tpu.memory_space<vmem>>, vector<1x128xf32>
    %15 = vector.broadcast %14 : vector<1x128xf32> to vector<16x128xf32>
    %16 = arith.addf %13, %15 : vector<16x128xf32>
    %c0_17 = arith.constant 0 : index
    %c0_18 = arith.constant 0 : index
    %c0_19 = arith.constant 0 : index
    %17 = vector.load %arg17[%c0_17, %c0_18, %c0_19] : memref<1x16x128xf32, #tpu.memory_space<vmem>>, vector<1x16x128xf32>
    %18 = vector.shape_cast %17 : vector<1x16x128xf32> to vector<16x128xf32>
    %19 = vector.shape_cast %16 : vector<16x128xf32> to vector<1x16x128xf32>
    tpu.vector_store %arg17[%c0_17, %c0_18, %c0_19], %19 {strides = array<i32>} : memref<1x16x128xf32, #tpu.memory_space<vmem>>, vector<1x16x128xf32>,
    %c0_20 = arith.constant 0 : index
    %c0_21 = arith.constant 0 : index
    %20 = vector.load %arg8[%c0_20, %c0_21] : memref<32x64xbf16, #tpu.memory_space<vmem>>, vector<32x64xbf16>
    %cst_22 = arith.constant dense<0.000000e+00> : vector<16x64xf32>
    %21 = tpu.matmul %1, %20, %cst_22 {dimension_numbers = #tpu.dot_dimension_numbers<[1], [0], [0], [1], [0, 0, 1, 1], [], []>} : vector<16x32xbf16>, vector<32x64xbf16>, vector<16x64xf32> -> vector<16x64xf32>
    %c0_23 = arith.constant 0 : index
    %c0_24 = arith.constant 0 : index
    %22 = vector.load %arg9[%c0_23, %c0_24] : memref<1x64xf32, #tpu.memory_space<vmem>>, vector<1x64xf32>
    %23 = vector.broadcast %22 : vector<1x64xf32> to vector<16x64xf32>
    %24 = arith.addf %21, %23 : vector<16x64xf32>
    %cst_25 = arith.constant 0.000000e+00 : f32
    %25 = vector.broadcast %cst_25 : f32 to vector<16x64xf32>
    %26 = arith.maximumf %24, %25 : vector<16x64xf32>
    %27 = vector.extract_strided_slice %26 {offsets = [0, 0], sizes = [16, 32], strides = [1, 1]} : vector<16x64xf32> to vector<16x32xf32>
    %28 = arith.truncf %27 : vector<16x32xf32> to vector<16x32xbf16>
    %29 = vector.extract_strided_slice %26 {offsets = [0, 32], sizes = [16, 32], strides = [1, 1]} : vector<16x64xf32> to vector<16x32xf32>
    %30 = arith.truncf %29 : vector<16x32xf32> to vector<16x32xbf16>
    %c0_26 = arith.constant 0 : index
    %c0_27 = arith.constant 0 : index
    %31 = vector.load %arg10[%c0_26, %c0_27] : memref<32x32xbf16, #tpu.memory_space<vmem>>, vector<32x32xbf16>
    %cst_28 = arith.constant dense<0.000000e+00> : vector<16x32xf32>
    %32 = tpu.matmul %28, %31, %cst_28 {dimension_numbers = #tpu.dot_dimension_numbers<[1], [0], [0], [1], [0, 0, 1, 1], [], []>} : vector<16x32xbf16>, vector<32x32xbf16>, vector<16x32xf32> -> vector<16x32xf32>
    %c0_29 = arith.constant 0 : index
    %c0_30 = arith.constant 0 : index
    %33 = vector.load %arg11[%c0_29, %c0_30] : memref<1x32xf32, #tpu.memory_space<vmem>>, vector<1x32xf32>
    %34 = vector.broadcast %33 : vector<1x32xf32> to vector<16x32xf32>
    %35 = arith.addf %32, %34 : vector<16x32xf32>
    %cst_31 = arith.constant 0.000000e+00 : f32
    %36 = vector.broadcast %cst_31 : f32 to vector<16x32xf32>
    %37 = arith.maximumf %35, %36 : vector<16x32xf32>
    %c0_32 = arith.constant 0 : index
    %c0_33 = arith.constant 0 : index
    %38 = vector.load %arg12[%c0_32, %c0_33] : memref<32x32xbf16, #tpu.memory_space<vmem>>, vector<32x32xbf16>
    %cst_34 = arith.constant dense<0.000000e+00> : vector<16x32xf32>
    %39 = tpu.matmul %30, %38, %cst_34 {dimension_numbers = #tpu.dot_dimension_numbers<[1], [0], [0], [1], [0, 0, 1, 1], [], []>} : vector<16x32xbf16>, vector<32x32xbf16>, vector<16x32xf32> -> vector<16x32xf32>
    %c0_35 = arith.constant 0 : index
    %c0_36 = arith.constant 0 : index
    %40 = vector.load %arg13[%c0_35, %c0_36] : memref<1x32xf32, #tpu.memory_space<vmem>>, vector<1x32xf32>
    %41 = vector.broadcast %40 : vector<1x32xf32> to vector<16x32xf32>
    %42 = arith.addf %39, %41 : vector<16x32xf32>
    %cst_37 = arith.constant 0.000000e+00 : f32
    %43 = vector.broadcast %cst_37 : f32 to vector<16x32xf32>
    %44 = arith.maximumf %42, %43 : vector<16x32xf32>
    %45 = tpu.concatenate %37, %44 in 1 : vector<16x32xf32>, vector<16x32xf32> -> vector<16x64xf32>
    %46 = arith.truncf %45 : vector<16x64xf32> to vector<16x64xbf16>
    %c0_38 = arith.constant 0 : index
    %c0_39 = arith.constant 0 : index
    %47 = vector.load %arg14[%c0_38, %c0_39] : memref<64x8xbf16, #tpu.memory_space<vmem>>, vector<64x8xbf16>
    %cst_40 = arith.constant dense<0.000000e+00> : vector<16x8xf32>
    %48 = tpu.matmul %46, %47, %cst_40 {dimension_numbers = #tpu.dot_dimension_numbers<[1], [0], [0], [1], [0, 0, 1, 1], [], []>} : vector<16x64xbf16>, vector<64x8xbf16>, vector<16x8xf32> -> vector<16x8xf32>
    %c0_41 = arith.constant 0 : index
    %c0_42 = arith.constant 0 : index
    %49 = vector.load %arg15[%c0_41, %c0_42] : memref<1x8xf32, #tpu.memory_space<vmem>>, vector<1x8xf32>
    %50 = vector.broadcast %49 : vector<1x8xf32> to vector<16x8xf32>
    %51 = arith.addf %48, %50 : vector<16x8xf32>
    %52 = arith.negf %51 : vector<16x8xf32>
    %53 = math.exp %52 : vector<16x8xf32>
    %cst_43 = arith.constant 1.000000e+00 : f32
    %54 = vector.broadcast %cst_43 : f32 to vector<16x8xf32>
    %55 = arith.addf %54, %53 : vector<16x8xf32>
    %56 = arith.divf %54, %55 : vector<16x8xf32>
    %c0_44 = arith.constant 0 : index
    %c0_45 = arith.constant 0 : index
    %c0_46 = arith.constant 0 : index
    %57 = vector.load %arg18[%c0_44, %c0_45, %c0_46] : memref<1x16x8xf32, #tpu.memory_space<vmem>>, vector<1x16x8xf32>
    %58 = vector.shape_cast %57 : vector<1x16x8xf32> to vector<16x8xf32>
    %59 = vector.shape_cast %56 : vector<16x8xf32> to vector<1x16x8xf32>
    tpu.vector_store %arg18[%c0_44, %c0_45, %c0_46], %59 {strides = array<i32>} : memref<1x16x8xf32, #tpu.memory_space<vmem>>, vector<1x16x8xf32>,
    return
  }
  func.func @transform_0(%arg0: i32, %arg1: i32) -> (i32, i32, i32) {
    %c0_i32 = arith.constant 0 : i32
    %c0_i32_0 = arith.constant 0 : i32
    return %arg0, %arg1, %c0_i32 : i32, i32, i32
  }
  func.func @transform_1(%arg0: i32, %arg1: i32) -> (i32, i32, i32) {
    %c0_i32 = arith.constant 0 : i32
    %c0_i32_0 = arith.constant 0 : i32
    return %arg0, %arg1, %c0_i32 : i32, i32, i32
  }
  func.func @transform_2(%arg0: i32, %arg1: i32) -> (i32, i32) {
    %c0_i32 = arith.constant 0 : i32
    %c0_i32_0 = arith.constant 0 : i32
    %c0_i32_1 = arith.constant 0 : i32
    return %c0_i32, %c0_i32_0 : i32, i32
  }
  func.func @transform_3(%arg0: i32, %arg1: i32) -> (i32, i32) {
    %c0_i32 = arith.constant 0 : i32
    %c0_i32_0 = arith.constant 0 : i32
    %c0_i32_1 = arith.constant 0 : i32
    return %c0_i32, %c0_i32_0 : i32, i32
  }
  func.func @transform_4(%arg0: i32, %arg1: i32) -> (i32, i32) {
    %c0_i32 = arith.constant 0 : i32
    %c0_i32_0 = arith.constant 0 : i32
    %c0_i32_1 = arith.constant 0 : i32
    return %c0_i32, %c0_i32_0 : i32, i32
  }
  func.func @transform_5(%arg0: i32, %arg1: i32) -> (i32, i32) {
    %c0_i32 = arith.constant 0 : i32
    %c0_i32_0 = arith.constant 0 : i32
    %c0_i32_1 = arith.constant 0 : i32
    return %c0_i32, %c0_i32_0 : i32, i32
  }
  func.func @transform_6(%arg0: i32, %arg1: i32) -> (i32, i32) {
    %c0_i32 = arith.constant 0 : i32
    %c0_i32_0 = arith.constant 0 : i32
    %c0_i32_1 = arith.constant 0 : i32
    return %c0_i32, %c0_i32_0 : i32, i32
  }
  func.func @transform_7(%arg0: i32, %arg1: i32) -> (i32, i32) {
    %c0_i32 = arith.constant 0 : i32
    %c0_i32_0 = arith.constant 0 : i32
    %c0_i32_1 = arith.constant 0 : i32
    return %c0_i32, %c0_i32_0 : i32, i32
  }
  func.func @transform_8(%arg0: i32, %arg1: i32) -> (i32, i32) {
    %c0_i32 = arith.constant 0 : i32
    %c0_i32_0 = arith.constant 0 : i32
    %c0_i32_1 = arith.constant 0 : i32
    return %c0_i32, %c0_i32_0 : i32, i32
  }
  func.func @transform_9(%arg0: i32, %arg1: i32) -> (i32, i32) {
    %c0_i32 = arith.constant 0 : i32
    %c0_i32_0 = arith.constant 0 : i32
    %c0_i32_1 = arith.constant 0 : i32
    return %c0_i32, %c0_i32_0 : i32, i32
  }
  func.func @transform_10(%arg0: i32, %arg1: i32) -> (i32, i32) {
    %c0_i32 = arith.constant 0 : i32
    %c0_i32_0 = arith.constant 0 : i32
    %c0_i32_1 = arith.constant 0 : i32
    return %c0_i32, %c0_i32_0 : i32, i32
  }
  func.func @transform_11(%arg0: i32, %arg1: i32) -> (i32, i32) {
    %c0_i32 = arith.constant 0 : i32
    %c0_i32_0 = arith.constant 0 : i32
    %c0_i32_1 = arith.constant 0 : i32
    return %c0_i32, %c0_i32_0 : i32, i32
  }
  func.func @transform_12(%arg0: i32, %arg1: i32) -> (i32, i32) {
    %c0_i32 = arith.constant 0 : i32
    %c0_i32_0 = arith.constant 0 : i32
    %c0_i32_1 = arith.constant 0 : i32
    return %c0_i32, %c0_i32_0 : i32, i32
  }
  func.func @transform_13(%arg0: i32, %arg1: i32) -> (i32, i32) {
    %c0_i32 = arith.constant 0 : i32
    %c0_i32_0 = arith.constant 0 : i32
    %c0_i32_1 = arith.constant 0 : i32
    return %c0_i32, %c0_i32_0 : i32, i32
  }
  func.func @transform_14(%arg0: i32, %arg1: i32) -> (i32, i32, i32) {
    %c0_i32 = arith.constant 0 : i32
    %c0_i32_0 = arith.constant 0 : i32
    return %arg0, %arg1, %c0_i32 : i32, i32, i32
  }
  func.func @transform_15(%arg0: i32, %arg1: i32) -> (i32, i32, i32) {
    %c0_i32 = arith.constant 0 : i32
    %c0_i32_0 = arith.constant 0 : i32
    return %arg0, %arg1, %c0_i32 : i32, i32, i32
  }
  func.func @transform_16(%arg0: i32, %arg1: i32) -> (i32, i32, i32) {
    %c0_i32 = arith.constant 0 : i32
    %c0_i32_0 = arith.constant 0 : i32
    return %arg0, %arg1, %c0_i32 : i32, i32, i32
  }
}

</mosaic_0001>

<llo_original>
// kernel: tpu_custom_call.1
$region0: #{tpu_custom_call.1}
  #allocation0 [shape = 'u32[]', space=smem, size = 0x4, offset = 0x4, fixed_abs, tag = 'smem constant byte address 0x4 - core index']
  #allocation1 [shape = 'u32[144,128]{1,0:T(1,128)}', space=vmem, size = 0x12000, scoped, tag = 'internal scratch']
  %s0 = inlined_call_operand.vmem [shape: bf16[3,16,32], index: 0, kind: input, shape index: {}]
  %s1 = inlined_call_operand.hbm [shape: bf16[3,16,32], index: 1, kind: input, shape index: {}]
  %s2 = inlined_call_operand.vmem [shape: bf16[32,128], index: 2, kind: input, shape index: {}]
  %s3 = inlined_call_operand.vmem [shape: f32[1,128], index: 3, kind: input, shape index: {}]
  %s4 = inlined_call_operand.hbm [shape: bf16[32,128], index: 4, kind: input, shape index: {}]
  %s5 = inlined_call_operand.hbm [shape: f32[1,128], index: 5, kind: input, shape index: {}]
  %s6 = inlined_call_operand.vmem [shape: bf16[32,64], index: 6, kind: input, shape index: {}]
  %s7 = inlined_call_operand.hbm [shape: f32[1,64], index: 7, kind: input, shape index: {}]
  %s8 = inlined_call_operand.hbm [shape: bf16[32,32], index: 8, kind: input, shape index: {}]
  %s9 = inlined_call_operand.hbm [shape: f32[1,32], index: 9, kind: input, shape index: {}]
  %s10 = inlined_call_operand.vmem [shape: bf16[32,32], index: 10, kind: input, shape index: {}]
  %s11 = inlined_call_operand.hbm [shape: f32[1,32], index: 11, kind: input, shape index: {}]
  %s12 = inlined_call_operand.vmem [shape: bf16[64,8], index: 12, kind: input, shape index: {}]
  %s13 = inlined_call_operand.vmem [shape: f32[1,8], index: 13, kind: input, shape index: {}]
  %s14 = inlined_call_operand.hbm [shape: f32[3,16,128], index: 14, kind: output, shape index: {0}]
  %s15 = inlined_call_operand.hbm [shape: f32[3,16,128], index: 15, kind: output, shape index: {1}]
  %s16 = inlined_call_operand.vmem [shape: f32[3,16,8], index: 16, kind: output, shape index: {2}]
  %17 = xla_tuple %s14, %s15, %s16
  %s18 = sld [smem:[#allocation0]]
  $region133: #{tpu_custom_call.1} parent=0
    _
  %s20 = ssub.s32 1, %s18
  %s21 = scalar_select 0, %s20, %s18
  $region1: #{tpu_custom_call.1} parent=0
    #allocation2 [shape = 'u8[8192]{0}', space=vmem, size = 0x2000, scoped, tag = 'input window, operand 1']
    #allocation3 [shape = 's32[2]{0}', space=sflag, size = 0x8, scoped, tag = 'scoped memory for tpu_custom_call.1']
    #allocation4 [shape = 's32[2]{0}', space=sflag, size = 0x8, scoped, tag = 'scoped memory for tpu_custom_call.1']
    #allocation5 [shape = 'u8[8192]{0}', space=vmem, size = 0x2000, scoped, tag = 'input window, operand 4, single buffered']
    #allocation6 [shape = 's32[1]{0}', space=sflag, size = 0x4, scoped, tag = 'scoped memory for tpu_custom_call.1']
    #allocation7 [shape = 'u8[512]{0}', space=vmem, size = 0x400, scoped, tag = 'input window, operand 5, single buffered']
    #allocation8 [shape = 'u8[512]{0}', space=vmem, size = 0x400, scoped, tag = 'input window, operand 7, single buffered']
    #allocation9 [shape = 's32[1]{0}', space=sflag, size = 0x4, scoped, tag = 'scoped memory for tpu_custom_call.1']
    #allocation10 [shape = 'u8[8192]{0}', space=vmem, size = 0x2000, scoped, tag = 'input window, operand 8, single buffered']
    #allocation11 [shape = 'u8[512]{0}', space=vmem, size = 0x400, scoped, tag = 'input window, operand 9, single buffered']
    #allocation12 [shape = 's32[1]{0}', space=sflag, size = 0x4, scoped, tag = 'scoped memory for tpu_custom_call.1']
    #allocation13 [shape = 'u8[512]{0}', space=vmem, size = 0x400, scoped, tag = 'input window, operand 11, single buffered']
    #allocation14 [shape = 'u8[16384]{0}', space=vmem, size = 0x4000, scoped, tag = 'output window, operand 0']
    #allocation15 [shape = 'u8[16384]{0}', space=vmem, size = 0x4000, scoped, tag = 'output window, operand 1']
    #allocation16 [shape = 's32[2]{0}', space=sflag, size = 0x8, scoped, tag = 'scoped memory for tpu_custom_call.1']
    %22 = vsyncpa [#allocation3], 0
    %s23 = scalar_lea.sflag [#allocation3], 1
    %24 = vsyncpa %s23, 0
    %25 = vsyncpa [#allocation6], 0
    %26 = vsyncpa [#allocation9], 0
    %27 = vsyncpa [#allocation12], 0
    %28 = vsyncpa [#allocation4], 0
    %s29 = scalar_lea.sflag [#allocation4], 1
    %30 = vsyncpa %s29, 0
    %31 = vsyncpa [#allocation16], 0
    %s32 = scalar_lea.sflag [#allocation16], 1
    %33 = vsyncpa %s32, 0
    loop: start=0, step=1, limit=5
    $region2: #{tpu_custom_call.1} parent=1 // loop_pre_header
      _
    $region3: #{tpu_custom_call.1} parent=1 // loop_header
      %s35 = sphi 0, %s39
      %p36 = scmp.ge.s32.totalorder %s35, 5
      %s42 = sphi 0, %s54
      %s43 = sphi 0, %s50
      %s44 = sphi 0, %s42
      %s45 = sphi 0, %s43
      %s46 = sphi 0, %s44
      %s47 = sphi 0, %s45
      %s59 = sphi 0, %s61
      %s62 = sphi 0, %s59
      %s63 = sphi 0, %s62
      %s79 = sphi 0, %s63
      %s87 = sphi 0, %s89
      %s90 = sphi 0, %s87
      %s91 = sphi 0, %s90
      %s107 = sphi 0, %s91
      %s111 = sphi 0, %s111
      %s113 = sphi 0, %s111
      %s114 = sphi 0, %s113
      %s128 = sphi 0, %s114
      %s132 = sphi 0, %s132
      %s134 = sphi 0, %s132
      %s135 = sphi 0, %s134
      %s149 = sphi 0, %s135
      %s153 = sphi 0, %s153
      %s155 = sphi 0, %s153
      %s156 = sphi 0, %s155
      %s170 = sphi 0, %s156
      %s174 = sphi 0, %s174
      %s176 = sphi 0, %s174
      %s177 = sphi 0, %s176
      %s191 = sphi 0, %s177
      %s195 = sphi 0, %s195
      %s197 = sphi 0, %s195
      %s198 = sphi 0, %s197
      %s212 = sphi 0, %s198
      %s216 = sphi 0, %s216
      %s218 = sphi 0, %s216
      %s219 = sphi 0, %s218
      %s233 = sphi 0, %s219
      %s237 = sphi 0, %s237
      %s239 = sphi 0, %s237
      %s240 = sphi 0, %s239
      %s254 = sphi 0, %s240
      %s258 = sphi 0, %s258
      %s260 = sphi 0, %s258
      %s261 = sphi 0, %s260
      %s275 = sphi 0, %s261
      %s279 = sphi 0, %s279
      %s281 = sphi 0, %s279
      %s282 = sphi 0, %s281
      %s296 = sphi 0, %s282
      %s300 = sphi 0, %s300
      %s302 = sphi 0, %s300
      %s303 = sphi 0, %s302
      %s317 = sphi 0, %s303
      %s321 = sphi 0, %s321
      %s323 = sphi 0, %s321
      %s324 = sphi 0, %s323
      %s338 = sphi 0, %s324
      %s342 = sphi 0, %s342
      %s344 = sphi 0, %s342
      %s345 = sphi 0, %s344
      %s359 = sphi 0, %s345
      %s367 = sphi 0, %s369
      %s370 = sphi 0, %s367
      %s371 = sphi 0, %s370
      %s387 = sphi 0, %s371
      %s395 = sphi 0, %s397
      %s398 = sphi 0, %s395
      %s399 = sphi 0, %s398
      %s415 = sphi 0, %s399
      %s423 = sphi 0, %s425
      %s426 = sphi 0, %s423
      %s427 = sphi 0, %s426
      %s443 = sphi 0, %s427
    $region4: #{tpu_custom_call.1} parent=1 // loop_header_branch
      %38 = sbr.rel (%p36) target = $region8
    $region5: #{tpu_custom_call.1} parent=1 // loop_body
      %s40 = ssub.s32 %s35, 1
      %s41 = ssub.s32 %s35, 2
      %s48 = sadd.s32 1, %s43
      %p49 = scmp.ge.s32.totalorder %s48, 1
      %s50 = scalar_select %p49, 0, %s48
      %s51 = sadd.s32 1, %s42
      %s52 = scalar_select %p49, %s51, %s42
      %p53 = scmp.ge.s32.totalorder %s52, 3
      %s54 = scalar_select %p53, 0, %s52
      %s55 = ssub.s32 %s42, %s54
      %s56 = ssub.s32 %s43, %s50
      %s57 = sor.u32 %s55, %s56
      %p58 = scmp.eq.s32.totalorder %s57, 0
      %s60 = sadd.s32 %s59, 1
      %s61 = scalar_select %p58, %s59, %s60
      %p64 = pneg %p58
      %p65 = scmp.eq.s32.totalorder %s35, 2
      %p66 = por %p64, %p65
      %p67 = scmp.ne.s32.totalorder %s59, %s62
      %p68 = scmp.eq.s32.totalorder %s35, 0
      %p69 = por %p67, %p68
      %p70 = scmp.ne.s32.totalorder %s59, %s62
      %p71 = scmp.eq.s32.totalorder %s40, 2
      %p72 = por %p70, %p71
      %p73 = scmp.ne.s32.totalorder %s62, %s63
      %p74 = scmp.eq.s32.totalorder %s40, 0
      %p75 = por %p73, %p74
      %p76 = scmp.ne.s32.totalorder %s62, %s63
      %p77 = scmp.eq.s32.totalorder %s41, 2
      %p78 = por %p76, %p77
      %p80 = scmp.ne.s32.totalorder %s63, %s79
      %p81 = scmp.eq.s32.totalorder %s41, 0
      %p82 = por %p80, %p81
      %s83 = ssub.s32 %s42, %s54
      %s84 = ssub.s32 %s43, %s50
      %s85 = sor.u32 %s83, %s84
      %p86 = scmp.eq.s32.totalorder %s85, 0
      %s88 = sadd.s32 %s87, 1
      %s89 = scalar_select %p86, %s87, %s88
      %p92 = pneg %p86
      %p93 = scmp.eq.s32.totalorder %s35, 2
      %p94 = por %p92, %p93
      %p95 = scmp.ne.s32.totalorder %s87, %s90
      %p96 = scmp.eq.s32.totalorder %s35, 0
      %p97 = por %p95, %p96
      %p98 = scmp.ne.s32.totalorder %s87, %s90
      %p99 = scmp.eq.s32.totalorder %s40, 2
      %p100 = por %p98, %p99
      %p101 = scmp.ne.s32.totalorder %s90, %s91
      %p102 = scmp.eq.s32.totalorder %s40, 0
      %p103 = por %p101, %p102
      %p104 = scmp.ne.s32.totalorder %s90, %s91
      %p105 = scmp.eq.s32.totalorder %s41, 2
      %p106 = por %p104, %p105
      %p108 = scmp.ne.s32.totalorder %s91, %s107
      %p109 = scmp.eq.s32.totalorder %s41, 0
      %p110 = por %p108, %p109
      %s112 = sadd.s32 %s111, 1
      %p115 = scmp.eq.s32.totalorder %s35, 2
      %p116 = scmp.ne.s32.totalorder %s111, %s113
      %p117 = scmp.eq.s32.totalorder %s35, 0
      %p118 = por %p116, %p117
      %p119 = scmp.ne.s32.totalorder %s111, %s113
      %p120 = scmp.eq.s32.totalorder %s40, 2
      %p121 = por %p119, %p120
      %p122 = scmp.ne.s32.totalorder %s113, %s114
      %p123 = scmp.eq.s32.totalorder %s40, 0
      %p124 = por %p122, %p123
      %p125 = scmp.ne.s32.totalorder %s113, %s114
      %p126 = scmp.eq.s32.totalorder %s41, 2
      %p127 = por %p125, %p126
      %p129 = scmp.ne.s32.totalorder %s114, %s128
      %p130 = scmp.eq.s32.totalorder %s41, 0
      %p131 = por %p129, %p130
      %s133 = sadd.s32 %s132, 1
      %p136 = scmp.eq.s32.totalorder %s35, 2
      %p137 = scmp.ne.s32.totalorder %s132, %s134
      %p138 = scmp.eq.s32.totalorder %s35, 0
      %p139 = por %p137, %p138
      %p140 = scmp.ne.s32.totalorder %s132, %s134
      %p141 = scmp.eq.s32.totalorder %s40, 2
      %p142 = por %p140, %p141
      %p143 = scmp.ne.s32.totalorder %s134, %s135
      %p144 = scmp.eq.s32.totalorder %s40, 0
      %p145 = por %p143, %p144
      %p146 = scmp.ne.s32.totalorder %s134, %s135
      %p147 = scmp.eq.s32.totalorder %s41, 2
      %p148 = por %p146, %p147
      %p150 = scmp.ne.s32.totalorder %s135, %s149
      %p151 = scmp.eq.s32.totalorder %s41, 0
      %p152 = por %p150, %p151
      %s154 = sadd.s32 %s153, 1
      %p157 = scmp.eq.s32.totalorder %s35, 2
      %p158 = scmp.ne.s32.totalorder %s153, %s155
      %p159 = scmp.eq.s32.totalorder %s35, 0
      %p160 = por %p158, %p159
      %p161 = scmp.ne.s32.totalorder %s153, %s155
      %p162 = scmp.eq.s32.totalorder %s40, 2
      %p163 = por %p161, %p162
      %p164 = scmp.ne.s32.totalorder %s155, %s156
      %p165 = scmp.eq.s32.totalorder %s40, 0
      %p166 = por %p164, %p165
      %p167 = scmp.ne.s32.totalorder %s155, %s156
      %p168 = scmp.eq.s32.totalorder %s41, 2
      %p169 = por %p167, %p168
      %p171 = scmp.ne.s32.totalorder %s156, %s170
      %p172 = scmp.eq.s32.totalorder %s41, 0
      %p173 = por %p171, %p172
      %s175 = sadd.s32 %s174, 1
      %p178 = scmp.eq.s32.totalorder %s35, 2
      %p179 = scmp.ne.s32.totalorder %s174, %s176
      %p180 = scmp.eq.s32.totalorder %s35, 0
      %p181 = por %p179, %p180
      %p182 = scmp.ne.s32.totalorder %s174, %s176
      %p183 = scmp.eq.s32.totalorder %s40, 2
      %p184 = por %p182, %p183
      %p185 = scmp.ne.s32.totalorder %s176, %s177
      %p186 = scmp.eq.s32.totalorder %s40, 0
      %p187 = por %p185, %p186
      %p188 = scmp.ne.s32.totalorder %s176, %s177
      %p189 = scmp.eq.s32.totalorder %s41, 2
      %p190 = por %p188, %p189
      %p192 = scmp.ne.s32.totalorder %s177, %s191
      %p193 = scmp.eq.s32.totalorder %s41, 0
      %p194 = por %p192, %p193
      %s196 = sadd.s32 %s195, 1
      %p199 = scmp.eq.s32.totalorder %s35, 2
      %p200 = scmp.ne.s32.totalorder %s195, %s197
      %p201 = scmp.eq.s32.totalorder %s35, 0
      %p202 = por %p200, %p201
      %p203 = scmp.ne.s32.totalorder %s195, %s197
      %p204 = scmp.eq.s32.totalorder %s40, 2
      %p205 = por %p203, %p204
      %p206 = scmp.ne.s32.totalorder %s197, %s198
      %p207 = scmp.eq.s32.totalorder %s40, 0
      %p208 = por %p206, %p207
      %p209 = scmp.ne.s32.totalorder %s197, %s198
      %p210 = scmp.eq.s32.totalorder %s41, 2
      %p211 = por %p209, %p210
      %p213 = scmp.ne.s32.totalorder %s198, %s212
      %p214 = scmp.eq.s32.totalorder %s41, 0
      %p215 = por %p213, %p214
      %s217 = sadd.s32 %s216, 1
      %p220 = scmp.eq.s32.totalorder %s35, 2
      %p221 = scmp.ne.s32.totalorder %s216, %s218
      %p222 = scmp.eq.s32.totalorder %s35, 0
      %p223 = por %p221, %p222
      %p224 = scmp.ne.s32.totalorder %s216, %s218
      %p225 = scmp.eq.s32.totalorder %s40, 2
      %p226 = por %p224, %p225
      %p227 = scmp.ne.s32.totalorder %s218, %s219
      %p228 = scmp.eq.s32.totalorder %s40, 0
      %p229 = por %p227, %p228
      %p230 = scmp.ne.s32.totalorder %s218, %s219
      %p231 = scmp.eq.s32.totalorder %s41, 2
      %p232 = por %p230, %p231
      %p234 = scmp.ne.s32.totalorder %s219, %s233
      %p235 = scmp.eq.s32.totalorder %s41, 0
      %p236 = por %p234, %p235
      %s238 = sadd.s32 %s237, 1
      %p241 = scmp.eq.s32.totalorder %s35, 2
      %p242 = scmp.ne.s32.totalorder %s237, %s239
      %p243 = scmp.eq.s32.totalorder %s35, 0
      %p244 = por %p242, %p243
      %p245 = scmp.ne.s32.totalorder %s237, %s239
      %p246 = scmp.eq.s32.totalorder %s40, 2
      %p247 = por %p245, %p246
      %p248 = scmp.ne.s32.totalorder %s239, %s240
      %p249 = scmp.eq.s32.totalorder %s40, 0
      %p250 = por %p248, %p249
      %p251 = scmp.ne.s32.totalorder %s239, %s240
      %p252 = scmp.eq.s32.totalorder %s41, 2
      %p253 = por %p251, %p252
      %p255 = scmp.ne.s32.totalorder %s240, %s254
      %p256 = scmp.eq.s32.totalorder %s41, 0
      %p257 = por %p255, %p256
      %s259 = sadd.s32 %s258, 1
      %p262 = scmp.eq.s32.totalorder %s35, 2
      %p263 = scmp.ne.s32.totalorder %s258, %s260
      %p264 = scmp.eq.s32.totalorder %s35, 0
      %p265 = por %p263, %p264
      %p266 = scmp.ne.s32.totalorder %s258, %s260
      %p267 = scmp.eq.s32.totalorder %s40, 2
      %p268 = por %p266, %p267
      %p269 = scmp.ne.s32.totalorder %s260, %s261
      %p270 = scmp.eq.s32.totalorder %s40, 0
      %p271 = por %p269, %p270
      %p272 = scmp.ne.s32.totalorder %s260, %s261
      %p273 = scmp.eq.s32.totalorder %s41, 2
      %p274 = por %p272, %p273
      %p276 = scmp.ne.s32.totalorder %s261, %s275
      %p277 = scmp.eq.s32.totalorder %s41, 0
      %p278 = por %p276, %p277
      %s280 = sadd.s32 %s279, 1
      %p283 = scmp.eq.s32.totalorder %s35, 2
      %p284 = scmp.ne.s32.totalorder %s279, %s281
      %p285 = scmp.eq.s32.totalorder %s35, 0
      %p286 = por %p284, %p285
      %p287 = scmp.ne.s32.totalorder %s279, %s281
      %p288 = scmp.eq.s32.totalorder %s40, 2
      %p289 = por %p287, %p288
      %p290 = scmp.ne.s32.totalorder %s281, %s282
      %p291 = scmp.eq.s32.totalorder %s40, 0
      %p292 = por %p290, %p291
      %p293 = scmp.ne.s32.totalorder %s281, %s282
      %p294 = scmp.eq.s32.totalorder %s41, 2
      %p295 = por %p293, %p294
      %p297 = scmp.ne.s32.totalorder %s282, %s296
      %p298 = scmp.eq.s32.totalorder %s41, 0
      %p299 = por %p297, %p298
      %s301 = sadd.s32 %s300, 1
      %p304 = scmp.eq.s32.totalorder %s35, 2
      %p305 = scmp.ne.s32.totalorder %s300, %s302
      %p306 = scmp.eq.s32.totalorder %s35, 0
      %p307 = por %p305, %p306
      %p308 = scmp.ne.s32.totalorder %s300, %s302
      %p309 = scmp.eq.s32.totalorder %s40, 2
      %p310 = por %p308, %p309
      %p311 = scmp.ne.s32.totalorder %s302, %s303
      %p312 = scmp.eq.s32.totalorder %s40, 0
      %p313 = por %p311, %p312
      %p314 = scmp.ne.s32.totalorder %s302, %s303
      %p315 = scmp.eq.s32.totalorder %s41, 2
      %p316 = por %p314, %p315
      %p318 = scmp.ne.s32.totalorder %s303, %s317
      %p319 = scmp.eq.s32.totalorder %s41, 0
      %p320 = por %p318, %p319
      %s322 = sadd.s32 %s321, 1
      %p325 = scmp.eq.s32.totalorder %s35, 2
      %p326 = scmp.ne.s32.totalorder %s321, %s323
      %p327 = scmp.eq.s32.totalorder %s35, 0
      %p328 = por %p326, %p327
      %p329 = scmp.ne.s32.totalorder %s321, %s323
      %p330 = scmp.eq.s32.totalorder %s40, 2
      %p331 = por %p329, %p330
      %p332 = scmp.ne.s32.totalorder %s323, %s324
      %p333 = scmp.eq.s32.totalorder %s40, 0
      %p334 = por %p332, %p333
      %p335 = scmp.ne.s32.totalorder %s323, %s324
      %p336 = scmp.eq.s32.totalorder %s41, 2
      %p337 = por %p335, %p336
      %p339 = scmp.ne.s32.totalorder %s324, %s338
      %p340 = scmp.eq.s32.totalorder %s41, 0
      %p341 = por %p339, %p340
      %s343 = sadd.s32 %s342, 1
      %p346 = scmp.eq.s32.totalorder %s35, 2
      %p347 = scmp.ne.s32.totalorder %s342, %s344
      %p348 = scmp.eq.s32.totalorder %s35, 0
      %p349 = por %p347, %p348
      %p350 = scmp.ne.s32.totalorder %s342, %s344
      %p351 = scmp.eq.s32.totalorder %s40, 2
      %p352 = por %p350, %p351
      %p353 = scmp.ne.s32.totalorder %s344, %s345
      %p354 = scmp.eq.s32.totalorder %s40, 0
      %p355 = por %p353, %p354
      %p356 = scmp.ne.s32.totalorder %s344, %s345
      %p357 = scmp.eq.s32.totalorder %s41, 2
      %p358 = por %p356, %p357
      %p360 = scmp.ne.s32.totalorder %s345, %s359
      %p361 = scmp.eq.s32.totalorder %s41, 0
      %p362 = por %p360, %p361
      %s363 = ssub.s32 %s42, %s54
      %s364 = ssub.s32 %s43, %s50
      %s365 = sor.u32 %s363, %s364
      %p366 = scmp.eq.s32.totalorder %s365, 0
      %s368 = sadd.s32 %s367, 1
      %s369 = scalar_select %p366, %s367, %s368
      %p372 = pneg %p366
      %p373 = scmp.eq.s32.totalorder %s35, 2
      %p374 = por %p372, %p373
      %p375 = scmp.ne.s32.totalorder %s367, %s370
      %p376 = scmp.eq.s32.totalorder %s35, 0
      %p377 = por %p375, %p376
      %p378 = scmp.ne.s32.totalorder %s367, %s370
      %p379 = scmp.eq.s32.totalorder %s40, 2
      %p380 = por %p378, %p379
      %p381 = scmp.ne.s32.totalorder %s370, %s371
      %p382 = scmp.eq.s32.totalorder %s40, 0
      %p383 = por %p381, %p382
      %p384 = scmp.ne.s32.totalorder %s370, %s371
      %p385 = scmp.eq.s32.totalorder %s41, 2
      %p386 = por %p384, %p385
      %p388 = scmp.ne.s32.totalorder %s371, %s387
      %p389 = scmp.eq.s32.totalorder %s41, 0
      %p390 = por %p388, %p389
      %s391 = ssub.s32 %s42, %s54
      %s392 = ssub.s32 %s43, %s50
      %s393 = sor.u32 %s391, %s392
      %p394 = scmp.eq.s32.totalorder %s393, 0
      %s396 = sadd.s32 %s395, 1
      %s397 = scalar_select %p394, %s395, %s396
      %p400 = pneg %p394
      %p401 = scmp.eq.s32.totalorder %s35, 2
      %p402 = por %p400, %p401
      %p403 = scmp.ne.s32.totalorder %s395, %s398
      %p404 = scmp.eq.s32.totalorder %s35, 0
      %p405 = por %p403, %p404
      %p406 = scmp.ne.s32.totalorder %s395, %s398
      %p407 = scmp.eq.s32.totalorder %s40, 2
      %p408 = por %p406, %p407
      %p409 = scmp.ne.s32.totalorder %s398, %s399
      %p410 = scmp.eq.s32.totalorder %s40, 0
      %p411 = por %p409, %p410
      %p412 = scmp.ne.s32.totalorder %s398, %s399
      %p413 = scmp.eq.s32.totalorder %s41, 2
      %p414 = por %p412, %p413
      %p416 = scmp.ne.s32.totalorder %s399, %s415
      %p417 = scmp.eq.s32.totalorder %s41, 0
      %p418 = por %p416, %p417
      %s419 = ssub.s32 %s42, %s54
      %s420 = ssub.s32 %s43, %s50
      %s421 = sor.u32 %s419, %s420
      %p422 = scmp.eq.s32.totalorder %s421, 0
      %s424 = sadd.s32 %s423, 1
      %s425 = scalar_select %p422, %s423, %s424
      %p428 = pneg %p422
      %p429 = scmp.eq.s32.totalorder %s35, 2
      %p430 = por %p428, %p429
      %p431 = scmp.ne.s32.totalorder %s423, %s426
      %p432 = scmp.eq.s32.totalorder %s35, 0
      %p433 = por %p431, %p432
      %p434 = scmp.ne.s32.totalorder %s423, %s426
      %p435 = scmp.eq.s32.totalorder %s40, 2
      %p436 = por %p434, %p435
      %p437 = scmp.ne.s32.totalorder %s426, %s427
      %p438 = scmp.eq.s32.totalorder %s40, 0
      %p439 = por %p437, %p438
      %p440 = scmp.ne.s32.totalorder %s426, %s427
      %p441 = scmp.eq.s32.totalorder %s41, 2
      %p442 = por %p440, %p441
      %p444 = scmp.ne.s32.totalorder %s427, %s443
      %p445 = scmp.eq.s32.totalorder %s41, 0
      %p446 = por %p444, %p445
      %p447 = scmp.le.s32.totalorder 1, %s35
      %p448 = scmp.lt.s32.totalorder %s35, 4
      %p449 = pnand %p447, %p448
      %p450 = pneg %p449
      // Predicated region
      $region9: #{tpu_custom_call.1} parent=5 // pred_check
        _
      $region10: #{tpu_custom_call.1} parent=5 // pred_check_branch
        %452 = sbr.rel (%p449) target = $region12
      $region11: #{tpu_custom_call.1} parent=5 // pred_region
        %s453 = ssub.s32 %s35, 1
        // Predicated region
        $region13: #{tpu_custom_call.1} parent=11 // pred_check
          %p454 = pneg %p124
        $region14: #{tpu_custom_call.1} parent=11 // pred_check_branch
          %456 = sbr.rel (%p454) target = $region16
        $region15: #{tpu_custom_call.1} parent=11 // pred_region
          _
        $region16: #{tpu_custom_call.1} parent=11 // pred_fallthru
          _
        // Predicated region
        $region17: #{tpu_custom_call.1} parent=11 // pred_check
          %p457 = pneg %p145
        $region18: #{tpu_custom_call.1} parent=11 // pred_check_branch
          %459 = sbr.rel (%p457) target = $region20
        $region19: #{tpu_custom_call.1} parent=11 // pred_region
          _
        $region20: #{tpu_custom_call.1} parent=11 // pred_fallthru
          _
        // Predicated region
        $region21: #{tpu_custom_call.1} parent=11 // pred_check
          %p460 = pneg %p166
        $region22: #{tpu_custom_call.1} parent=11 // pred_check_branch
          %462 = sbr.rel (%p460) target = $region24
        $region23: #{tpu_custom_call.1} parent=11 // pred_region
          %s464 = ssub.s32 256, 256
          %465 = vsyncadd [#allocation6], %s464
          %s466 = sshll.u32 [#allocation5], 4
          %s467 = int_to_ptr.vmem [resolvable:$true] %s466
          %472 = dma.hbm_to_vmem [thread:$0]  %s4, 256, %s467, [#allocation6], 64, 64, 4
        $region24: #{tpu_custom_call.1} parent=11 // pred_fallthru
          _
        // Predicated region
        $region25: #{tpu_custom_call.1} parent=11 // pred_check
          %p473 = pneg %p187
        $region26: #{tpu_custom_call.1} parent=11 // pred_check_branch
          %475 = sbr.rel (%p473) target = $region28
        $region27: #{tpu_custom_call.1} parent=11 // pred_region
          %s477 = ssub.s32 16, 16
          %478 = vsyncadd [#allocation6], %s477
          %s480 = sshll.u32 [#allocation7], 4
          %s481 = int_to_ptr.vmem [resolvable:$true] %s480
          %483 = dma.hbm_to_vmem [thread:$0]  %s5, 16, %s481, [#allocation6]
        $region28: #{tpu_custom_call.1} parent=11 // pred_fallthru
          _
        // Predicated region
        $region29: #{tpu_custom_call.1} parent=11 // pred_check
          %p484 = pneg %p208
        $region30: #{tpu_custom_call.1} parent=11 // pred_check_branch
          %486 = sbr.rel (%p484) target = $region32
        $region31: #{tpu_custom_call.1} parent=11 // pred_region
          _
        $region32: #{tpu_custom_call.1} parent=11 // pred_fallthru
          _
        // Predicated region
        $region33: #{tpu_custom_call.1} parent=11 // pred_check
          %p487 = pneg %p229
        $region34: #{tpu_custom_call.1} parent=11 // pred_check_branch
          %489 = sbr.rel (%p487) target = $region36
        $region35: #{tpu_custom_call.1} parent=11 // pred_region
          %s491 = ssub.s32 16, 16
          %492 = vsyncadd [#allocation9], %s491
          %s494 = sshll.u32 [#allocation8], 4
          %s495 = int_to_ptr.vmem [resolvable:$true] %s494
          %497 = dma.hbm_to_vmem [thread:$0]  %s7, 16, %s495, [#allocation9]
        $region36: #{tpu_custom_call.1} parent=11 // pred_fallthru
          _
        // Predicated region
        $region37: #{tpu_custom_call.1} parent=11 // pred_check
          %p498 = pneg %p250
        $region38: #{tpu_custom_call.1} parent=11 // pred_check_branch
          %500 = sbr.rel (%p498) target = $region40
        $region39: #{tpu_custom_call.1} parent=11 // pred_region
          %s502 = ssub.s32 256, 256
          %503 = vsyncadd [#allocation9], %s502
          %s504 = sshll.u32 [#allocation10], 4
          %s505 = int_to_ptr.vmem [resolvable:$true] %s504
          %510 = dma.hbm_to_vmem [thread:$0]  %s8, 256, %s505, [#allocation9], 64, 64, 4
        $region40: #{tpu_custom_call.1} parent=11 // pred_fallthru
          _
        // Predicated region
        $region41: #{tpu_custom_call.1} parent=11 // pred_check
          %p511 = pneg %p271
        $region42: #{tpu_custom_call.1} parent=11 // pred_check_branch
          %513 = sbr.rel (%p511) target = $region44
        $region43: #{tpu_custom_call.1} parent=11 // pred_region
          %s515 = ssub.s32 16, 16
          %516 = vsyncadd [#allocation12], %s515
          %s518 = sshll.u32 [#allocation11], 4
          %s519 = int_to_ptr.vmem [resolvable:$true] %s518
          %521 = dma.hbm_to_vmem [thread:$0]  %s9, 16, %s519, [#allocation12]
        $region44: #{tpu_custom_call.1} parent=11 // pred_fallthru
          _
        // Predicated region
        $region45: #{tpu_custom_call.1} parent=11 // pred_check
          %p522 = pneg %p292
        $region46: #{tpu_custom_call.1} parent=11 // pred_check_branch
          %524 = sbr.rel (%p522) target = $region48
        $region47: #{tpu_custom_call.1} parent=11 // pred_region
          _
        $region48: #{tpu_custom_call.1} parent=11 // pred_fallthru
          _
        // Predicated region
        $region49: #{tpu_custom_call.1} parent=11 // pred_check
          %p525 = pneg %p313
        $region50: #{tpu_custom_call.1} parent=11 // pred_check_branch
          %527 = sbr.rel (%p525) target = $region52
        $region51: #{tpu_custom_call.1} parent=11 // pred_region
          %s529 = ssub.s32 16, 16
          %530 = vsyncadd [#allocation12], %s529
          %s532 = sshll.u32 [#allocation13], 4
          %s533 = int_to_ptr.vmem [resolvable:$true] %s532
          %535 = dma.hbm_to_vmem [thread:$0]  %s11, 16, %s533, [#allocation12]
        $region52: #{tpu_custom_call.1} parent=11 // pred_fallthru
          _
        // Predicated region
        $region53: #{tpu_custom_call.1} parent=11 // pred_check
          %p536 = pneg %p334
        $region54: #{tpu_custom_call.1} parent=11 // pred_check_branch
          %538 = sbr.rel (%p536) target = $region56
        $region55: #{tpu_custom_call.1} parent=11 // pred_region
          _
        $region56: #{tpu_custom_call.1} parent=11 // pred_fallthru
          _
        // Predicated region
        $region57: #{tpu_custom_call.1} parent=11 // pred_check
          %p539 = pneg %p355
        $region58: #{tpu_custom_call.1} parent=11 // pred_check_branch
          %541 = sbr.rel (%p539) target = $region60
        $region59: #{tpu_custom_call.1} parent=11 // pred_region
          _
        $region60: #{tpu_custom_call.1} parent=11 // pred_fallthru
          _
      $region12: #{tpu_custom_call.1} parent=5 // pred_fallthru
        _
      %p542 = scmp.lt.s32.totalorder %s35, 3
      // Predicated region
      $region61: #{tpu_custom_call.1} parent=5 // pred_check
        %p543 = pneg %p542
      $region62: #{tpu_custom_call.1} parent=5 // pred_check_branch
        %545 = sbr.rel (%p543) target = $region64
      $region63: #{tpu_custom_call.1} parent=5 // pred_region
        // Predicated region
        $region65: #{tpu_custom_call.1} parent=63 // pred_check
          %p546 = pneg %p69
        $region66: #{tpu_custom_call.1} parent=63 // pred_check_branch
          %548 = sbr.rel (%p546) target = $region68
        $region67: #{tpu_custom_call.1} parent=63 // pred_region
          %s549 = smul.u32 2, %s43
          %p550 = scmp.lt.s32.totalorder %s42, 2
          %s551 = scalar_select %p550, %s42, 2
          %p552 = scmp.lt.s32.totalorder %s549, 1
          %s553 = scalar_select %p552, %s549, 1
          %s554 = smul.addr %s551, 2
          %s555 = sadd.s32 %s553, %s554
          %s556 = smul.addr %s555, 4
          %s557 = scalar_lea.vmem %s0, %s556
          %s558 = smul.u32 2, %s43
        $region68: #{tpu_custom_call.1} parent=63 // pred_fallthru
          _
        // Predicated region
        $region69: #{tpu_custom_call.1} parent=63 // pred_check
          %p559 = pneg %p97
        $region70: #{tpu_custom_call.1} parent=63 // pred_check_branch
          %561 = sbr.rel (%p559) target = $region72
        $region71: #{tpu_custom_call.1} parent=63 // pred_region
          %s562 = sand.u32 %s87, 1
          %s563 = scalar_lea.sflag [#allocation3], %s562
          %s564 = sand.u32 %s87, 1
          %s565 = smul.addr %s564, 8
          %s566 = scalar_lea.vmem [#allocation2], %s565
          %s567 = smul.u32 2, %s43
          %s569 = ssub.s32 128, 128
          %570 = vsyncadd %s563, %s569
          %s571 = smul.addr %s42, 2
          %s572 = sadd.s32 %s567, %s571
          %s573 = smul.addr %s572, 64
          %s574 = scalar_lea.hbm %s1, %s573
          %s575 = sshll.u32 %s566, 4
          %s576 = int_to_ptr.vmem [resolvable:$true] %s575
          %581 = dma.hbm_to_vmem [thread:$0]  %s574, 128, %s576, %s563, 64, 64, 4
        $region72: #{tpu_custom_call.1} parent=63 // pred_fallthru
          _
      $region64: #{tpu_custom_call.1} parent=5 // pred_fallthru
        _
      %p582 = scmp.le.s32.totalorder 1, %s35
      %p583 = scmp.lt.s32.totalorder %s35, 4
      %p584 = pnand %p582, %p583
      %p585 = pneg %p584
      // Predicated region
      $region73: #{tpu_custom_call.1} parent=5 // pred_check
        _
      $region74: #{tpu_custom_call.1} parent=5 // pred_check_branch
        %587 = sbr.rel (%p584) target = $region76
      $region75: #{tpu_custom_call.1} parent=5 // pred_region
        %s588 = ssub.s32 %s35, 1
        %s589 = sand.u32 %s90, 1
        %s590 = scalar_lea.sflag [#allocation3], %s589
        %s591 = sand.u32 %s90, 1
        %s592 = smul.addr %s591, 8
        %s593 = scalar_lea.vmem [#allocation2], %s592
        // Predicated region
        $region77: #{tpu_custom_call.1} parent=75 // pred_check
          %p594 = pneg %p103
        $region78: #{tpu_custom_call.1} parent=75 // pred_check_branch
          %596 = sbr.rel (%p594) target = $region80
        $region79: #{tpu_custom_call.1} parent=75 // pred_region
          %597 = dma.done %s590, 128
        $region80: #{tpu_custom_call.1} parent=75 // pred_fallthru
          _
        // Predicated region
        $region81: #{tpu_custom_call.1} parent=75 // pred_check
          %p598 = pneg %p166
        $region82: #{tpu_custom_call.1} parent=75 // pred_check_branch
          %600 = sbr.rel (%p598) target = $region84
        $region83: #{tpu_custom_call.1} parent=75 // pred_region
          %601 = dma.done [#allocation6], 256
        $region84: #{tpu_custom_call.1} parent=75 // pred_fallthru
          _
        // Predicated region
        $region85: #{tpu_custom_call.1} parent=75 // pred_check
          %p602 = pneg %p187
        $region86: #{tpu_custom_call.1} parent=75 // pred_check_branch
          %604 = sbr.rel (%p602) target = $region88
        $region87: #{tpu_custom_call.1} parent=75 // pred_region
          %605 = dma.done [#allocation6], 16
        $region88: #{tpu_custom_call.1} parent=75 // pred_fallthru
          _
        // Predicated region
        $region89: #{tpu_custom_call.1} parent=75 // pred_check
          %p606 = pneg %p229
        $region90: #{tpu_custom_call.1} parent=75 // pred_check_branch
          %608 = sbr.rel (%p606) target = $region92
        $region91: #{tpu_custom_call.1} parent=75 // pred_region
          %609 = dma.done [#allocation9], 16
        $region92: #{tpu_custom_call.1} parent=75 // pred_fallthru
          _
        // Predicated region
        $region93: #{tpu_custom_call.1} parent=75 // pred_check
          %p610 = pneg %p250
        $region94: #{tpu_custom_call.1} parent=75 // pred_check_branch
          %612 = sbr.rel (%p610) target = $region96
        $region95: #{tpu_custom_call.1} parent=75 // pred_region
          %613 = dma.done [#allocation9], 256
        $region96: #{tpu_custom_call.1} parent=75 // pred_fallthru
          _
        // Predicated region
        $region97: #{tpu_custom_call.1} parent=75 // pred_check
          %p614 = pneg %p271
        $region98: #{tpu_custom_call.1} parent=75 // pred_check_branch
          %616 = sbr.rel (%p614) target = $region100
        $region99: #{tpu_custom_call.1} parent=75 // pred_region
          %617 = dma.done [#allocation12], 16
        $region100: #{tpu_custom_call.1} parent=75 // pred_fallthru
          _
        // Predicated region
        $region101: #{tpu_custom_call.1} parent=75 // pred_check
          %p618 = pneg %p313
        $region102: #{tpu_custom_call.1} parent=75 // pred_check_branch
          %620 = sbr.rel (%p618) target = $region104
        $region103: #{tpu_custom_call.1} parent=75 // pred_region
          %621 = dma.done [#allocation12], 16
        $region104: #{tpu_custom_call.1} parent=75 // pred_fallthru
          _
        %s622 = smul.u32 2, %s45
        %p623 = scmp.lt.s32.totalorder %s44, 2
        %s624 = scalar_select %p623, %s44, 2
        %p625 = scmp.lt.s32.totalorder %s622, 1
        %s626 = scalar_select %p625, %s622, 1
        %s627 = smul.addr %s624, 2
        %s628 = sadd.s32 %s626, %s627
        %s629 = smul.addr %s628, 4
        %s630 = scalar_lea.vmem %s0, %s629
        %p631 = pneg %p75
        %p632 = pneg %p72
        %s633 = sand.u32 %s90, 1
        %s634 = scalar_lea.sflag [#allocation3], %s633
        %s635 = sand.u32 %s90, 1
        %s636 = smul.addr %s635, 8
        %s637 = scalar_lea.vmem [#allocation2], %s636
        %p638 = pneg %p103
        %p639 = pneg %p100
        %p640 = pneg %p124
        %p641 = pneg %p121
        %p642 = pneg %p145
        %p643 = pneg %p142
        %p644 = pneg %p166
        %p645 = pneg %p163
        %p646 = pneg %p187
        %p647 = pneg %p184
        %p648 = pneg %p208
        %p649 = pneg %p205
        %p650 = pneg %p229
        %p651 = pneg %p226
        %p652 = pneg %p250
        %p653 = pneg %p247
        %p654 = pneg %p271
        %p655 = pneg %p268
        %p656 = pneg %p292
        %p657 = pneg %p289
        %p658 = pneg %p313
        %p659 = pneg %p310
        %p660 = pneg %p334
        %p661 = pneg %p331
        %p662 = pneg %p355
        %p663 = pneg %p352
        %p664 = pneg %p383
        %p665 = pneg %p380
        %s666 = sand.u32 %s370, 1
        %s667 = scalar_lea.sflag [#allocation4], %s666
        %s668 = sand.u32 %s370, 1
        %s669 = smul.addr %s668, 16
        %s670 = scalar_lea.vmem [#allocation14], %s669
        %p671 = pneg %p411
        %p672 = pneg %p408
        %s673 = sand.u32 %s398, 1
        %s674 = scalar_lea.sflag [#allocation16], %s673
        %s675 = sand.u32 %s398, 1
        %s676 = smul.addr %s675, 16
        %s677 = scalar_lea.vmem [#allocation15], %s676
        %p678 = pneg %p439
        %p679 = pneg %p436
        %s680 = smul.u32 2, %s45
        %p681 = scmp.lt.s32.totalorder %s44, 2
        %s682 = scalar_select %p681, %s44, 2
        %p683 = scmp.lt.s32.totalorder %s680, 1
        %s684 = scalar_select %p683, %s680, 1
        %s685 = smul.addr %s682, 2
        %s686 = sadd.s32 %s684, %s685
        %s687 = smul.addr %s686, 8
        %s688 = scalar_lea.vmem %s16, %s687
        %s689 = smul.u32 2, %s45
        %p690 = scmp.lt.s32.totalorder %s44, 2
        %s691 = scalar_select %p690, %s44, 2
        %p692 = scmp.lt.s32.totalorder %s689, 1
        %s693 = scalar_select %p692, %s689, 1
        %s694 = smul.addr %s691, 2
        %s695 = sadd.s32 %s693, %s694
        %s696 = smul.addr %s695, 4
        %s697 = scalar_lea.vmem %s0, %s696
        %s698 = smul.u32 2, %s45
        %s699 = smul.u32 2, %s45
        %s700 = smul.u32 2, %s45
        %s701 = smul.u32 2, %s45
        %s702 = smul.u32 2, %s45
        %p703 = scmp.lt.s32.totalorder %s44, 2
        %s704 = scalar_select %p703, %s44, 2
        %p705 = scmp.lt.s32.totalorder %s702, 1
        %s706 = scalar_select %p705, %s702, 1
        %s707 = smul.addr %s704, 2
        %s708 = sadd.s32 %s706, %s707
        %s709 = smul.addr %s708, 8
        %s710 = scalar_lea.vmem %s16, %s709
        %s711 = smul.u32 2, %s45
        %v713 = vld [vmem:[%s697] sm:$0xf]
        %v714 = vld [vmem:[%s697 + $0x4] sm:$0xf]
        %v715 = vld [vmem:[%s593] sm:$0xf]
        %v716 = vld [vmem:[%s593 + $0x4] sm:$0xf]
        %v717 = vld [vmem:[%s2] sm:$0xf]
        %v718 = vld [vmem:[%s2 + $0x4] sm:$0xf]
        %v719 = vld [vmem:[%s2 + $0x8] sm:$0xf]
        %v720 = vld [vmem:[%s2 + $0xc] sm:$0xf]
        %v721 = vld [vmem:[%s3] sm:$0x1]
        %v723 = vlaneseq
        %v724 = vshrl.u32 %v723, 7
        %v725 = vsub.s32 0, %v724
        %v726 = vrot.slane %v721, %v725
        %v730 = vunpack.c.l.b16 %v713
        %v731 = vunpack.c.l.b16 %v714
        %v732 = vpack.c.b16 %v731, %v730
        %v737 = vunpack.c.l.b16 %v717
        %v738 = vunpack.c.l.b16 %v718
        %v739 = vunpack.c.l.b16 %v719
        %v740 = vunpack.c.l.b16 %v720
        %v741 = vpack.c.b16 %v738, %v737
        %v742 = vpack.c.b16 %v740, %v739
        %vm745 = vcmask 261120
        %v747 = vsel %vm745, %v732, 0
        %749 = vmatprep.subr.bf16.mxu0 0
        %750 = vmatpush1.bf16.msra.mxu0 %v741
        %751 = vmatprep.subr.bf16.mxu0 0
        %752 = vmatpush1.bf16.msra.mxu0 %v742
        %753 = vmatprep.subr.bf16.mxu0 0
        %754 = vmatpush1.bf16.msra.mxu0 0
        %755 = vmatprep.subr.bf16.mxu0 0
        %756 = vmatpush1.bf16.msra.mxu0 0
        %757 = vmatprep.subr.bf16.mxu0 0
        %758 = vmatpush1.bf16.msra.mxu0 0
        %759 = vmatprep.subr.bf16.mxu0 0
        %760 = vmatpush1.bf16.msra.mxu0 0
        %761 = vmatprep.subr.bf16.mxu0 0
        %762 = vmatpush1.bf16.msra.mxu0 0
        %763 = vmatprep.subr.bf16.mxu0 0
        %764 = vmatpush1.bf16.msra.mxu0 0
        %765 = vmatprep.subr.bf16.mxu0 0
        %766 = vmatpush1.bf16.msra.mxu0 0
        %767 = vmatprep.subr.bf16.mxu0 0
        %768 = vmatpush1.bf16.msra.mxu0 0
        %769 = vmatprep.subr.bf16.mxu0 0
        %770 = vmatpush1.bf16.msra.mxu0 0
        %771 = vmatprep.subr.bf16.mxu0 0
        %772 = vmatpush1.bf16.msra.mxu0 0
        %773 = vmatprep.subr.bf16.mxu0 0
        %774 = vmatpush1.bf16.msra.mxu0 0
        %775 = vmatprep.subr.bf16.mxu0 0
        %776 = vmatpush1.bf16.msra.mxu0 0
        %777 = vmatprep.subr.bf16.mxu0 0
        %778 = vmatpush1.bf16.msra.mxu0 0
        %779 = vmatprep.subr.bf16.mxu0 0
        %780 = vmatpush1.bf16.msra.mxu0 0
        %781 = vmatprep.mubr.bf16.mxu0 0
        %782 = vmatmul.mubr.bf16.gmra.mrb[0].mxu0 %v747
        %v783 = vpop.f32.mrb[0].mxu0
        %v784 = vadd.f32 %v726, %v783
        %v785 = vpop.f32.mrb[0].mxu0
        %v786 = vpop.f32.mrb[0].mxu0
        %v787 = vadd.f32 %v726, %v786
        %v788 = vpop.f32.mrb[0].mxu0
        %789 = vdwg.mxu0
        %790 = vst [vmem:[%s670] sm:$0xff] %v784
        %791 = vst [vmem:[%s670 + $0x8] sm:$0xff] %v787
        %v792 = vld [vmem:[#allocation5] sm:$0xf]
        %v793 = vld [vmem:[#allocation5 + $0x4] sm:$0xf]
        %v794 = vld [vmem:[#allocation5 + $0x8] sm:$0xf]
        %v795 = vld [vmem:[#allocation5 + $0xc] sm:$0xf]
        %v796 = vld [vmem:[#allocation7] sm:$0x1]
        %v798 = vlaneseq
        %v799 = vshrl.u32 %v798, 7
        %v800 = vsub.s32 0, %v799
        %v801 = vrot.slane %v796, %v800
        %v805 = vunpack.c.l.b16 %v715
        %v806 = vunpack.c.l.b16 %v716
        %v807 = vpack.c.b16 %v806, %v805
        %v812 = vunpack.c.l.b16 %v792
        %v813 = vunpack.c.l.b16 %v793
        %v814 = vunpack.c.l.b16 %v794
        %v815 = vunpack.c.l.b16 %v795
        %v816 = vpack.c.b16 %v813, %v812
        %v817 = vpack.c.b16 %v815, %v814
        %v821 = vsel %vm745, %v807, 0
        %823 = vmatprep.subr.bf16.mxu0 0
        %824 = vmatpush1.bf16.msra.mxu0 %v816
        %825 = vmatprep.subr.bf16.mxu0 0
        %826 = vmatpush1.bf16.msra.mxu0 %v817
        %827 = vmatprep.subr.bf16.mxu0 0
        %828 = vmatpush1.bf16.msra.mxu0 0
        %829 = vmatprep.subr.bf16.mxu0 0
        %830 = vmatpush1.bf16.msra.mxu0 0
        %831 = vmatprep.subr.bf16.mxu0 0
        %832 = vmatpush1.bf16.msra.mxu0 0
        %833 = vmatprep.subr.bf16.mxu0 0
        %834 = vmatpush1.bf16.msra.mxu0 0
        %835 = vmatprep.subr.bf16.mxu0 0
        %836 = vmatpush1.bf16.msra.mxu0 0
        %837 = vmatprep.subr.bf16.mxu0 0
        %838 = vmatpush1.bf16.msra.mxu0 0
        %839 = vmatprep.subr.bf16.mxu0 0
        %840 = vmatpush1.bf16.msra.mxu0 0
        %841 = vmatprep.subr.bf16.mxu0 0
        %842 = vmatpush1.bf16.msra.mxu0 0
        %843 = vmatprep.subr.bf16.mxu0 0
        %844 = vmatpush1.bf16.msra.mxu0 0
        %845 = vmatprep.subr.bf16.mxu0 0
        %846 = vmatpush1.bf16.msra.mxu0 0
        %847 = vmatprep.subr.bf16.mxu0 0
        %848 = vmatpush1.bf16.msra.mxu0 0
        %849 = vmatprep.subr.bf16.mxu0 0
        %850 = vmatpush1.bf16.msra.mxu0 0
        %851 = vmatprep.subr.bf16.mxu0 0
        %852 = vmatpush1.bf16.msra.mxu0 0
        %853 = vmatprep.subr.bf16.mxu0 0
        %854 = vmatpush1.bf16.msra.mxu0 0
        %855 = vmatprep.mubr.bf16.mxu0 0
        %856 = vmatmul.mubr.bf16.gmra.mrb[0].mxu0 %v821
        %v857 = vpop.f32.mrb[0].mxu0
        %v858 = vadd.f32 %v801, %v857
        %v859 = vpop.f32.mrb[0].mxu0
        %v860 = vpop.f32.mrb[0].mxu0
        %v861 = vadd.f32 %v801, %v860
        %v862 = vpop.f32.mrb[0].mxu0
        %863 = vdwg.mxu0
        %864 = vst [vmem:[%s677] sm:$0xff] %v858
        %865 = vst [vmem:[%s677 + $0x8] sm:$0xff] %v861
        %v866 = vld [vmem:[%s6] sm:$0xf]
        %v867 = vld [vmem:[%s6 + $0x4] sm:$0xf]
        %v868 = vld [vmem:[%s6 + $0x8] sm:$0xf]
        %v869 = vld [vmem:[%s6 + $0xc] sm:$0xf]
        %v870 = vld [vmem:[#allocation8] sm:$0x1]
        %v872 = vlaneseq
        %v873 = vshrl.u32 %v872, 7
        %v874 = vsub.s32 0, %v873
        %v875 = vrot.slane %v870, %v874
        %v881 = vunpack.c.l.b16 %v866
        %v882 = vunpack.c.l.b16 %v867
        %v883 = vunpack.c.l.b16 %v868
        %v884 = vunpack.c.l.b16 %v869
        %v885 = vpack.c.b16 %v882, %v881
        %v886 = vpack.c.b16 %v884, %v883
        %889 = vmatprep.subr.bf16.mxu0 0
        %890 = vmatpush1.bf16.msra.mxu0 %v885
        %891 = vmatprep.subr.bf16.mxu0 0
        %892 = vmatpush1.bf16.msra.mxu0 %v886
        %893 = vmatprep.subr.bf16.mxu0 0
        %894 = vmatpush1.bf16.msra.mxu0 0
        %895 = vmatprep.subr.bf16.mxu0 0
        %896 = vmatpush1.bf16.msra.mxu0 0
        %897 = vmatprep.subr.bf16.mxu0 0
        %898 = vmatpush1.bf16.msra.mxu0 0
        %899 = vmatprep.subr.bf16.mxu0 0
        %900 = vmatpush1.bf16.msra.mxu0 0
        %901 = vmatprep.subr.bf16.mxu0 0
        %902 = vmatpush1.bf16.msra.mxu0 0
        %903 = vmatprep.subr.bf16.mxu0 0
        %904 = vmatpush1.bf16.msra.mxu0 0
        %905 = vmatprep.subr.bf16.mxu0 0
        %906 = vmatpush1.bf16.msra.mxu0 0
        %907 = vmatprep.subr.bf16.mxu0 0
        %908 = vmatpush1.bf16.msra.mxu0 0
        %909 = vmatprep.subr.bf16.mxu0 0
        %910 = vmatpush1.bf16.msra.mxu0 0
        %911 = vmatprep.subr.bf16.mxu0 0
        %912 = vmatpush1.bf16.msra.mxu0 0
        %913 = vmatprep.subr.bf16.mxu0 0
        %914 = vmatpush1.bf16.msra.mxu0 0
        %915 = vmatprep.subr.bf16.mxu0 0
        %916 = vmatpush1.bf16.msra.mxu0 0
        %917 = vmatprep.subr.bf16.mxu0 0
        %918 = vmatpush1.bf16.msra.mxu0 0
        %919 = vmatprep.subr.bf16.mxu0 0
        %920 = vmatpush1.bf16.msra.mxu0 0
        %921 = vmatprep.mubr.bf16.mxu0 0
        %922 = vmatmul.mubr.bf16.gmra.mrb[0].mxu0 %v747
        %v923 = vpop.f32.mrb[0].mxu0
        %v924 = vadd.f32 %v875, %v923
        %v925 = vpop.f32.mrb[0].mxu0
        %v926 = vpop.f32.mrb[0].mxu0
        %v927 = vadd.f32 %v875, %v926
        %v928 = vpop.f32.mrb[0].mxu0
        %929 = vdwg.mxu0
        %v930 = vmax.f32 %v924, 0.0
        %v931 = vmax.f32 %v927, 0.0
        %v932 = vpack.c.bf16 %v931, %v930
        %v933 = vld [vmem:[#allocation10] sm:$0xf]
        %v934 = vld [vmem:[#allocation10 + $0x4] sm:$0xf]
        %v935 = vld [vmem:[#allocation10 + $0x8] sm:$0xf]
        %v936 = vld [vmem:[#allocation10 + $0xc] sm:$0xf]
        %v937 = vld [vmem:[#allocation11] sm:$0x1]
        %v939 = vlaneseq
        %v940 = vshrl.u32 %v939, 7
        %v941 = vsub.s32 0, %v940
        %v942 = vrot.slane %v937, %v941
        %v948 = vunpack.c.l.b16 %v933
        %v949 = vunpack.c.l.b16 %v934
        %v950 = vunpack.c.l.b16 %v935
        %v951 = vunpack.c.l.b16 %v936
        %v952 = vpack.c.b16 %v949, %v948
        %v953 = vpack.c.b16 %v951, %v950
        %v957 = vsel %vm745, %v932, 0
        %959 = vmatprep.subr.bf16.mxu0 0
        %960 = vmatpush1.bf16.msra.mxu0 %v952
        %961 = vmatprep.subr.bf16.mxu0 0
        %962 = vmatpush1.bf16.msra.mxu0 %v953
        %963 = vmatprep.subr.bf16.mxu0 0
        %964 = vmatpush1.bf16.msra.mxu0 0
        %965 = vmatprep.subr.bf16.mxu0 0
        %966 = vmatpush1.bf16.msra.mxu0 0
        %967 = vmatprep.subr.bf16.mxu0 0
        %968 = vmatpush1.bf16.msra.mxu0 0
        %969 = vmatprep.subr.bf16.mxu0 0
        %970 = vmatpush1.bf16.msra.mxu0 0
        %971 = vmatprep.subr.bf16.mxu0 0
        %972 = vmatpush1.bf16.msra.mxu0 0
        %973 = vmatprep.subr.bf16.mxu0 0
        %974 = vmatpush1.bf16.msra.mxu0 0
        %975 = vmatprep.subr.bf16.mxu0 0
        %976 = vmatpush1.bf16.msra.mxu0 0
        %977 = vmatprep.subr.bf16.mxu0 0
        %978 = vmatpush1.bf16.msra.mxu0 0
        %979 = vmatprep.subr.bf16.mxu0 0
        %980 = vmatpush1.bf16.msra.mxu0 0
        %981 = vmatprep.subr.bf16.mxu0 0
        %982 = vmatpush1.bf16.msra.mxu0 0
        %983 = vmatprep.subr.bf16.mxu0 0
        %984 = vmatpush1.bf16.msra.mxu0 0
        %985 = vmatprep.subr.bf16.mxu0 0
        %986 = vmatpush1.bf16.msra.mxu0 0
        %987 = vmatprep.subr.bf16.mxu0 0
        %988 = vmatpush1.bf16.msra.mxu0 0
        %989 = vmatprep.subr.bf16.mxu0 0
        %990 = vmatpush1.bf16.msra.mxu0 0
        %991 = vmatprep.mubr.bf16.mxu0 0
        %992 = vmatmul.mubr.bf16.gmra.mrb[0].mxu0 %v957
        %v993 = vpop.f32.mrb[0].mxu0
        %v994 = vadd.f32 %v942, %v993
        %v995 = vpop.f32.mrb[0].mxu0
        %v996 = vpop.f32.mrb[0].mxu0
        %v997 = vadd.f32 %v942, %v996
        %v998 = vpop.f32.mrb[0].mxu0
        %999 = vdwg.mxu0
        %v1000 = vmax.f32 %v994, 0.0
        %v1001 = vmax.f32 %v997, 0.0
        %v1002 = vld [vmem:[%s10] sm:$0xf]
        %v1003 = vld [vmem:[%s10 + $0x4] sm:$0xf]
        %v1004 = vld [vmem:[%s10 + $0x8] sm:$0xf]
        %v1005 = vld [vmem:[%s10 + $0xc] sm:$0xf]
        %v1006 = vld [vmem:[#allocation13] sm:$0x1]
        %v1008 = vlaneseq
        %v1009 = vshrl.u32 %v1008, 7
        %v1010 = vsub.s32 0, %v1009
        %v1011 = vrot.slane %v1006, %v1010
        %1014 = vrot.lane.b32.xlu0 %v932, 96
        %v1015 = vpop.permute.xlu0 %1014
        %v1020 = vunpack.c.l.b16 %v1002
        %v1021 = vunpack.c.l.b16 %v1003
        %v1022 = vunpack.c.l.b16 %v1004
        %v1023 = vunpack.c.l.b16 %v1005
        %v1024 = vpack.c.b16 %v1021, %v1020
        %v1025 = vpack.c.b16 %v1023, %v1022
        %v1029 = vsel %vm745, %v1015, 0
        %1031 = vmatprep.subr.bf16.mxu0 0
        %1032 = vmatpush1.bf16.msra.mxu0 %v1024
        %1033 = vmatprep.subr.bf16.mxu0 0
        %1034 = vmatpush1.bf16.msra.mxu0 %v1025
        %1035 = vmatprep.subr.bf16.mxu0 0
        %1036 = vmatpush1.bf16.msra.mxu0 0
        %1037 = vmatprep.subr.bf16.mxu0 0
        %1038 = vmatpush1.bf16.msra.mxu0 0
        %1039 = vmatprep.subr.bf16.mxu0 0
        %1040 = vmatpush1.bf16.msra.mxu0 0
        %1041 = vmatprep.subr.bf16.mxu0 0
        %1042 = vmatpush1.bf16.msra.mxu0 0
        %1043 = vmatprep.subr.bf16.mxu0 0
        %1044 = vmatpush1.bf16.msra.mxu0 0
        %1045 = vmatprep.subr.bf16.mxu0 0
        %1046 = vmatpush1.bf16.msra.mxu0 0
        %1047 = vmatprep.subr.bf16.mxu0 0
        %1048 = vmatpush1.bf16.msra.mxu0 0
        %1049 = vmatprep.subr.bf16.mxu0 0
        %1050 = vmatpush1.bf16.msra.mxu0 0
        %1051 = vmatprep.subr.bf16.mxu0 0
        %1052 = vmatpush1.bf16.msra.mxu0 0
        %1053 = vmatprep.subr.bf16.mxu0 0
        %1054 = vmatpush1.bf16.msra.mxu0 0
        %1055 = vmatprep.subr.bf16.mxu0 0
        %1056 = vmatpush1.bf16.msra.mxu0 0
        %1057 = vmatprep.subr.bf16.mxu0 0
        %1058 = vmatpush1.bf16.msra.mxu0 0
        %1059 = vmatprep.subr.bf16.mxu0 0
        %1060 = vmatpush1.bf16.msra.mxu0 0
        %1061 = vmatprep.subr.bf16.mxu0 0
        %1062 = vmatpush1.bf16.msra.mxu0 0
        %1063 = vmatprep.mubr.bf16.mxu0 0
        %1064 = vmatmul.mubr.bf16.gmra.mrb[0].mxu0 %v1029
        %v1065 = vpop.f32.mrb[0].mxu0
        %v1066 = vadd.f32 %v1011, %v1065
        %v1067 = vpop.f32.mrb[0].mxu0
        %v1068 = vpop.f32.mrb[0].mxu0
        %v1069 = vadd.f32 %v1011, %v1068
        %v1070 = vpop.f32.mrb[0].mxu0
        %1071 = vdwg.mxu0
        %v1072 = vmax.f32 %v1066, 0.0
        %v1073 = vmax.f32 %v1069, 0.0
        %1076 = vrot.lane.b32.xlu0 %v1072, 32
        %v1077 = vpop.permute.xlu0 %1076
        %1078 = vrot.lane.b32.xlu0 %v1073, 32
        %v1079 = vpop.permute.xlu0 %1078
        %v1082 = vsel %vm745, %v1000, %v1077
        %v1083 = vsel %vm745, %v1001, %v1079
        %v1084 = vpack.c.bf16 %v1083, %v1082
        %v1085 = vld [vmem:[%s12] sm:$0xf]
        %v1086 = vld [vmem:[%s12 + $0x4] sm:$0xf]
        %v1087 = vld [vmem:[%s12 + $0x8] sm:$0xf]
        %v1088 = vld [vmem:[%s12 + $0xc] sm:$0xf]
        %v1089 = vld [vmem:[%s12 + $0x10] sm:$0xf]
        %v1090 = vld [vmem:[%s12 + $0x14] sm:$0xf]
        %v1091 = vld [vmem:[%s12 + $0x18] sm:$0xf]
        %v1092 = vld [vmem:[%s12 + $0x1c] sm:$0xf]
        %v1093 = vld [vmem:[%s13] sm:$0x1]
        %v1095 = vlaneseq
        %v1096 = vshrl.u32 %v1095, 7
        %v1097 = vsub.s32 0, %v1096
        %v1098 = vrot.slane %v1093, %v1097
        %v1108 = vunpack.c.l.b16 %v1085
        %v1109 = vunpack.c.l.b16 %v1086
        %v1110 = vunpack.c.l.b16 %v1087
        %v1111 = vunpack.c.l.b16 %v1088
        %v1112 = vunpack.c.l.b16 %v1089
        %v1113 = vunpack.c.l.b16 %v1090
        %v1114 = vunpack.c.l.b16 %v1091
        %v1115 = vunpack.c.l.b16 %v1092
        %v1116 = vpack.c.b16 %v1109, %v1108
        %v1117 = vpack.c.b16 %v1111, %v1110
        %v1118 = vpack.c.b16 %v1113, %v1112
        %v1119 = vpack.c.b16 %v1115, %v1114
        %vm1124 = vcmask 523264
        %v1126 = vsel %vm1124, %v1084, 0
        %1128 = vmatprep.subr.bf16.mxu0 0
        %1129 = vmatpush1.bf16.msra.mxu0 %v1116
        %1130 = vmatprep.subr.bf16.mxu0 0
        %1131 = vmatpush1.bf16.msra.mxu0 %v1117
        %1132 = vmatprep.subr.bf16.mxu0 0
        %1133 = vmatpush1.bf16.msra.mxu0 %v1118
        %1134 = vmatprep.subr.bf16.mxu0 0
        %1135 = vmatpush1.bf16.msra.mxu0 %v1119
        %1136 = vmatprep.subr.bf16.mxu0 0
        %1137 = vmatpush1.bf16.msra.mxu0 0
        %1138 = vmatprep.subr.bf16.mxu0 0
        %1139 = vmatpush1.bf16.msra.mxu0 0
        %1140 = vmatprep.subr.bf16.mxu0 0
        %1141 = vmatpush1.bf16.msra.mxu0 0
        %1142 = vmatprep.subr.bf16.mxu0 0
        %1143 = vmatpush1.bf16.msra.mxu0 0
        %1144 = vmatprep.subr.bf16.mxu0 0
        %1145 = vmatpush1.bf16.msra.mxu0 0
        %1146 = vmatprep.subr.bf16.mxu0 0
        %1147 = vmatpush1.bf16.msra.mxu0 0
        %1148 = vmatprep.subr.bf16.mxu0 0
        %1149 = vmatpush1.bf16.msra.mxu0 0
        %1150 = vmatprep.subr.bf16.mxu0 0
        %1151 = vmatpush1.bf16.msra.mxu0 0
        %1152 = vmatprep.subr.bf16.mxu0 0
        %1153 = vmatpush1.bf16.msra.mxu0 0
        %1154 = vmatprep.subr.bf16.mxu0 0
        %1155 = vmatpush1.bf16.msra.mxu0 0
        %1156 = vmatprep.subr.bf16.mxu0 0
        %1157 = vmatpush1.bf16.msra.mxu0 0
        %1158 = vmatprep.subr.bf16.mxu0 0
        %1159 = vmatpush1.bf16.msra.mxu0 0
        %1160 = vmatprep.mubr.bf16.mxu0 0
        %1161 = vmatmul.mubr.bf16.gmra.mrb[0].mxu0 %v1126
        %v1162 = vpop.f32.mrb[0].mxu0
        %v1163 = vadd.f32 %v1098, %v1162
        %v1164 = vpop.f32.mrb[0].mxu0
        %v1165 = vpop.f32.mrb[0].mxu0
        %v1166 = vadd.f32 %v1098, %v1165
        %v1167 = vpop.f32.mrb[0].mxu0
        %1168 = vdwg.mxu0
        %v1169 = vxor.u32 %v1163, 2147483648
        %v1170 = vxor.u32 %v1166, 2147483648
        %v1171 = vmul.f32 %v1169, 1.442695
        %v1172 = vpow.pop %v1171
        %v1173 = vmul.f32 %v1170, 1.442695
        %v1174 = vpow.pop %v1173
        %v1175 = vadd.f32 %v1172, 1.0
        %v1176 = vadd.f32 %v1174, 1.0
        %v1177 = vrcp.pop %v1175
        %v1178 = vmul.f32 1.0, %v1177
        %v1179 = vrcp.pop %v1176
        %v1180 = vmul.f32 1.0, %v1179
        %vm1181 = vcmask 64512
        %1182 = vst.msk [vmem:[%s710] sm:$0xff] %vm1181, %v1178
        %1183 = vst.msk [vmem:[%s710 + $0x8] sm:$0xff] %vm1181, %v1180
        %s1184 = sand.u32 %s370, 1
        %s1185 = scalar_lea.sflag [#allocation4], %s1184
        %s1186 = sand.u32 %s370, 1
        %s1187 = smul.addr %s1186, 16
        %s1188 = scalar_lea.vmem [#allocation14], %s1187
        %s1189 = sand.u32 %s398, 1
        %s1190 = scalar_lea.sflag [#allocation16], %s1189
        %s1191 = sand.u32 %s398, 1
        %s1192 = smul.addr %s1191, 16
        %s1193 = scalar_lea.vmem [#allocation15], %s1192
        %s1194 = smul.u32 2, %s45
        %p1195 = scmp.lt.s32.totalorder %s44, 2
        %s1196 = scalar_select %p1195, %s44, 2
        %p1197 = scmp.lt.s32.totalorder %s1194, 1
        %s1198 = scalar_select %p1197, %s1194, 1
        %s1199 = smul.addr %s1196, 2
        %s1200 = sadd.s32 %s1198, %s1199
        %s1201 = smul.addr %s1200, 8
        %s1202 = scalar_lea.vmem %s16, %s1201
        // Predicated region
        $region105: #{tpu_custom_call.1} parent=75 // pred_check
          %p1203 = pneg %p380
        $region106: #{tpu_custom_call.1} parent=75 // pred_check_branch
          %1205 = sbr.rel (%p1203) target = $region108
        $region107: #{tpu_custom_call.1} parent=75 // pred_region
          %s1206 = smul.u32 2, %s45
          %s1208 = ssub.s32 256, 256
          %1209 = vsyncadd %s1185, %s1208
          %s1210 = smul.addr %s44, 2
          %s1211 = sadd.s32 %s1206, %s1210
          %s1212 = smul.addr %s1211, 128
          %s1213 = scalar_lea.hbm %s14, %s1212
          %s1214 = sshll.u32 %s1188, 4
          %s1215 = int_to_ptr.vmem [resolvable:$true] %s1214
          %1220 = dma.vmem_to_hbm [thread:$0]  %s1215, 256, %s1213, %s1185, 128, 128, 8
        $region108: #{tpu_custom_call.1} parent=75 // pred_fallthru
          _
        // Predicated region
        $region109: #{tpu_custom_call.1} parent=75 // pred_check
          %p1221 = pneg %p408
        $region110: #{tpu_custom_call.1} parent=75 // pred_check_branch
          %1223 = sbr.rel (%p1221) target = $region112
        $region111: #{tpu_custom_call.1} parent=75 // pred_region
          %s1224 = smul.u32 2, %s45
          %s1226 = ssub.s32 256, 256
          %1227 = vsyncadd %s1190, %s1226
          %s1228 = smul.addr %s44, 2
          %s1229 = sadd.s32 %s1224, %s1228
          %s1230 = smul.addr %s1229, 128
          %s1231 = scalar_lea.hbm %s15, %s1230
          %s1232 = sshll.u32 %s1193, 4
          %s1233 = int_to_ptr.vmem [resolvable:$true] %s1232
          %1238 = dma.vmem_to_hbm [thread:$0]  %s1233, 256, %s1231, %s1190, 128, 128, 8
        $region112: #{tpu_custom_call.1} parent=75 // pred_fallthru
          _
        // Predicated region
        $region113: #{tpu_custom_call.1} parent=75 // pred_check
          %p1239 = pneg %p436
        $region114: #{tpu_custom_call.1} parent=75 // pred_check_branch
          %1241 = sbr.rel (%p1239) target = $region116
        $region115: #{tpu_custom_call.1} parent=75 // pred_region
          %s1242 = smul.u32 2, %s45
        $region116: #{tpu_custom_call.1} parent=75 // pred_fallthru
          _
      $region76: #{tpu_custom_call.1} parent=5 // pred_fallthru
        _
      %p1243 = scmp.le.s32.totalorder 2, %s35
      // Predicated region
      $region117: #{tpu_custom_call.1} parent=5 // pred_check
        %p1244 = pneg %p1243
      $region118: #{tpu_custom_call.1} parent=5 // pred_check_branch
        %1246 = sbr.rel (%p1244) target = $region120
      $region119: #{tpu_custom_call.1} parent=5 // pred_region
        %s1247 = ssub.s32 %s35, 2
        // Predicated region
        $region121: #{tpu_custom_call.1} parent=119 // pred_check
          %p1248 = pneg %p386
        $region122: #{tpu_custom_call.1} parent=119 // pred_check_branch
          %1250 = sbr.rel (%p1248) target = $region124
        $region123: #{tpu_custom_call.1} parent=119 // pred_region
          %s1251 = sand.u32 %s371, 1
          %s1252 = scalar_lea.sflag [#allocation4], %s1251
          %s1253 = sand.u32 %s371, 1
          %s1254 = smul.addr %s1253, 16
          %s1255 = scalar_lea.vmem [#allocation14], %s1254
          %1256 = dma.done %s1252, 256
        $region124: #{tpu_custom_call.1} parent=119 // pred_fallthru
          _
        // Predicated region
        $region125: #{tpu_custom_call.1} parent=119 // pred_check
          %p1257 = pneg %p414
        $region126: #{tpu_custom_call.1} parent=119 // pred_check_branch
          %1259 = sbr.rel (%p1257) target = $region128
        $region127: #{tpu_custom_call.1} parent=119 // pred_region
          %s1260 = sand.u32 %s399, 1
          %s1261 = scalar_lea.sflag [#allocation16], %s1260
          %s1262 = sand.u32 %s399, 1
          %s1263 = smul.addr %s1262, 16
          %s1264 = scalar_lea.vmem [#allocation15], %s1263
          %1265 = dma.done %s1261, 256
        $region128: #{tpu_custom_call.1} parent=119 // pred_fallthru
          _
        // Predicated region
        $region129: #{tpu_custom_call.1} parent=119 // pred_check
          %p1266 = pneg %p442
        $region130: #{tpu_custom_call.1} parent=119 // pred_check_branch
          %1268 = sbr.rel (%p1266) target = $region132
        $region131: #{tpu_custom_call.1} parent=119 // pred_region
          %s1269 = smul.u32 2, %s47
          %p1270 = scmp.lt.s32.totalorder %s46, 2
          %s1271 = scalar_select %p1270, %s46, 2
          %p1272 = scmp.lt.s32.totalorder %s1269, 1
          %s1273 = scalar_select %p1272, %s1269, 1
          %s1274 = smul.addr %s1271, 2
          %s1275 = sadd.s32 %s1273, %s1274
          %s1276 = smul.addr %s1275, 8
          %s1277 = scalar_lea.vmem %s16, %s1276
        $region132: #{tpu_custom_call.1} parent=119 // pred_fallthru
          _
      $region120: #{tpu_custom_call.1} parent=5 // pred_fallthru
        _
    $region6: #{tpu_custom_call.1} parent=1 // loop_footer
      %s39 = sadd.s32 1, %s35
    $region7: #{tpu_custom_call.1} parent=1 // loop_footer_branch
      %34 = sbr.rel target = $region3
    $region8: #{tpu_custom_call.1} parent=1 // loop_exit
      _
    %1278 = vsyncpa [#allocation3], 1
    %s1279 = scalar_lea.sflag [#allocation3], 1
    %1280 = vsyncpa %s1279, 1
    %1281 = vsyncpa [#allocation6], 1
    %1282 = vsyncpa [#allocation9], 1
    %1283 = vsyncpa [#allocation12], 1
    %1284 = vsyncpa [#allocation4], 1
    %s1285 = scalar_lea.sflag [#allocation4], 1
    %1286 = vsyncpa %s1285, 1
    %1287 = vsyncpa [#allocation16], 1
    %s1288 = scalar_lea.sflag [#allocation16], 1
    %1289 = vsyncpa %s1288, 1

</llo_original>
